<compile_context>
chip_gen: v7x
topology: tpu7x:2x2x1
jax: 0.10.0
libtpu: 0.0.40
codegen_flags: <defaults>
</compile_context>

<pallas_src>
import jax
import jax.numpy as jnp
from jax import lax
from jax.experimental import pallas as pl
from jax.experimental.pallas import tpu as pltpu


# ---------------------------------------------------------------------------
# Kernel
# ---------------------------------------------------------------------------
def _make_wavefront_lstm_kernel(T, B, BP, H, num_layers):
    """Fused multi-layer LSTM with a wavefront (skewed) layer/time schedule.

    Ref layout (positional):
      x_ref          : (T*BP, D)   batch-padded, flattened input sequence
      w0ih_t_ref     : (D, 4H)     layer-0 input->hidden weights, transposed
      b0_ref         : (1, 4H)     layer-0 combined bias (b_ih + b_hh)
      wpair_refs[l]  : l < L-1 -> (H, 8H) = [W_l_hh^T | W_{l+1}_ih^T]
                       l = L-1 -> (H, 4H) =  W_{L-1}_hh^T
      b_refs[l-1]    : (1, 4H)     combined bias of layer l (l >= 1)
      out_ref        : (B, H)      top-layer hidden state at t = T-1
    """
    H4 = 4 * H
    L = num_layers

    def kernel(*refs):
        x_ref = refs[0]
        w0ih_t_ref = refs[1]
        b0_ref = refs[2]
        wpair_refs = refs[3:3 + L]
        b_refs = refs[3 + L:3 + L + (L - 1)]
        out_ref = refs[-1]

        # ---- Hoisted weight/bias loads (all VMEM resident).
        w0ih_t = w0ih_t_ref[...]                       # (D, 4H)
        b0 = b0_ref[...]                               # (1, 4H)
        wpair = [r[...] for r in wpair_refs]
        bias = [None] + [r[...] for r in b_refs]       # bias[l] for l >= 1

        # ---- Layer-0 input projection for ALL timesteps in one matmul,
        #      bias folded in (implicit sublane broadcast of the (1,4H) row).
        xproj = jnp.dot(x_ref[...], w0ih_t,
                        preferred_element_type=jnp.float32) + b0   # (T*BP, 4H)

        # ---- Hoisted gate-selection lane mask: g block -> tanh, rest sigmoid.
        lane = lax.broadcasted_iota(jnp.int32, (BP, H4), 1)
        g_mask = (lane >= 2 * H) & (lane < 3 * H)

        def cell(gates, c):
            # Two full-vreg EUP passes + one VPU select instead of four
            # 32-lane sliced transcendentals.  PyTorch gate order: i, f, g, o.
            sig = jax.nn.sigmoid(gates)
            tnh = jnp.tanh(gates)
            act = jnp.where(g_mask, tnh, sig)          # [i | f | g | o]
            i = act[:, 0 * H:1 * H]
            f = act[:, 1 * H:2 * H]
            g = act[:, 2 * H:3 * H]
            o = act[:, 3 * H:4 * H]
            c_new = f * c + i * g
            h_new = o * jnp.tanh(c_new)
            return h_new, c_new

        zeros = jnp.zeros((BP, H), jnp.float32)
        hs = [zeros] * L      # hs[l] = most recent h of layer l (h_l[-1] = 0)
        cs = [zeros] * L

        # ---- Wavefront over diagonals d: layer l computes time t = d - l.
        #      Within a diagonal everything is independent (layer l at t only
        #      depends on layer l-1 at t and layer l at t-1, both from d-1).
        for d in range(T + L - 1):
            # Phase 1: fused matmuls for this diagonal (mutually independent,
            # pushed back-to-back to the MXU).
            P = [None] * L
            for l in range(L):
                t_l = d - l
                need_rec = (l <= d <= l + T - 1) and (t_l >= 1)
                need_next = (l + 1 < L) and (l + 1 <= d <= l + T)
                if need_rec or need_next:
                    # hs[l] currently holds h_l[d-1-l].
                    P[l] = jnp.dot(hs[l], wpair[l],
                                   preferred_element_type=jnp.float32)

            # Phase 2: cell updates (independent across layers).
            for l in range(L):
                t_l = d - l
                if 0 <= t_l <= T - 1:
                    if l == 0:
                        # vreg-aligned (BP, 4H) slice of the precomputed proj.
                        g = xproj[t_l * BP:(t_l + 1) * BP, :]
                        if t_l >= 1:
                            g = g + P[0][:, :H4]
                    else:
                        # input-from-below half of layer l-1's fused product
                        g = P[l - 1][:, H4:2 * H4] + bias[l]
                        if t_l >= 1:
                            g = g + P[l][:, :H4]
                    hs[l], cs[l] = cell(g, cs[l])
            # dropout = 0.0 between layers -> no-op

        # Only lstm_out[-1] is needed: single small (B, H) store.
        out_ref[...] = hs[L - 1][:B, :].astype(out_ref.dtype)

    return kernel


# ---------------------------------------------------------------------------
# Wrapper
# ---------------------------------------------------------------------------
def prepack_lstm_params(params):
    """ONE-TIME weight packing (keep out of the per-call hot path).

    params : list over layers of (w_ih (4H, D_l), w_hh (4H, H),
                                  b_ih (4H,), b_hh (4H,))
    Returns the tuple of packed operands expected by the kernel.
    """
    L = len(params)
    H = params[0][1].shape[1]
    H4 = 4 * H

    w0_ih, _, b0_ih, b0_hh = params[0]
    packed = [jnp.transpose(w0_ih),                    # (D, 4H)
              (b0_ih + b0_hh).reshape(1, H4)]          # (1, 4H)
    for l in range(L):
        whh_t = jnp.transpose(params[l][1])            # (H, 4H)
        if l + 1 < L:
            wih_next_t = jnp.transpose(params[l + 1][0])   # (H, 4H)
            packed.append(jnp.concatenate([whh_t, wih_next_t], axis=1))  # (H, 8H)
        else:
            packed.append(whh_t)                       # (H, 4H)
    for l in range(1, L):
        b_ih, b_hh = params[l][2], params[l][3]
        packed.append((b_ih + b_hh).reshape(1, H4))    # (1, 4H)
    return tuple(jnp.asarray(p, jnp.float32) for p in packed)


def lstm_predictor_forward(x, packed, *, num_layers, hidden_dim):
    """Fused forward of LSTMPredictor_multiclassifier: returns lstm_out[-1].

    x      : (T, B, D) float32  (batch_first=False)
    packed : output of prepack_lstm_params (computed once at init)
    """
    T, B, D = x.shape
    H = hidden_dim
    BP = ((B + 7) // 8) * 8                            # pad batch to sublanes

    # Batch-pad so every per-timestep slice inside the kernel is vreg-aligned.
    x_pad = jnp.pad(x, ((0, 0), (0, BP - B), (0, 0)))
    x_flat = x_pad.reshape(T * BP, D)

    kernel = _make_wavefront_lstm_kernel(T, B, BP, H, num_layers)
    vmem = pl.BlockSpec(memory_space=pltpu.MemorySpace.VMEM)
    n_in = 1 + len(packed)

    return pl.pallas_call(
        kernel,
        out_shape=jax.ShapeDtypeStruct((B, H), jnp.float32),
        in_specs=[vmem] * n_in,
        out_specs=vmem,
    )(x_flat, *packed)


# ---------------------------------------------------------------------------
# Pure-JAX reference (mirrors torch.nn.LSTM exactly) for correctness check.
# ---------------------------------------------------------------------------
def _lstm_layer_ref(x, w_ih, w_hh, b_ih, b_hh):
    T, B, _ = x.shape
    H = w_hh.shape[1]

    def step(carry, x_t):
        h, c = carry
        gates = x_t @ w_ih.T + h @ w_hh.T + b_ih + b_hh
        i = jax.nn.sigmoid(gates[:, 0 * H:1 * H])
        f = jax.nn.sigmoid(gates[:, 1 * H:2 * H])
        g = jnp.tanh(gates[:, 2 * H:3 * H])
        o = jax.nn.sigmoid(gates[:, 3 * H:4 * H])
        c = f * c + i * g
        h = o * jnp.tanh(c)
        return (h, c), h

    init = (jnp.zeros((B, H), jnp.float32), jnp.zeros((B, H), jnp.float32))
    _, hs = lax.scan(step, init, x)
    return hs


def _forward_ref(x, params):
    h = x
    for (w_ih, w_hh, b_ih, b_hh) in params:
        h = _lstm_layer_ref(h, w_ih, w_hh, b_ih, b_hh)
    return h[-1]


# ---------------------------------------------------------------------------
def make_params(key, input_dim, hidden_dim, num_layers):
    """Deterministic init matching nn.LSTM shapes: U(-1/sqrt(H), 1/sqrt(H))."""
    params = []
    bound = 1.0 / jnp.sqrt(jnp.float32(hidden_dim))
    for layer in range(num_layers):
        d_in = input_dim if layer == 0 else hidden_dim
        key, k1, k2, k3, k4 = jax.random.split(key, 5)
        w_ih = jax.random.uniform(k1, (4 * hidden_dim, d_in), jnp.float32,
                                  -bound, bound)
        w_hh = jax.random.uniform(k2, (4 * hidden_dim, hidden_dim), jnp.float32,
                                  -bound, bound)
        b_ih = jax.random.uniform(k3, (4 * hidden_dim,), jnp.float32,
                                  -bound, bound)
        b_hh = jax.random.uniform(k4, (4 * hidden_dim,), jnp.float32,
                                  -bound, bound)
        params.append((w_ih, w_hh, b_ih, b_hh))
    return params


if __name__ == "__main__":
    # Module hyperparameters
    hidden_dim = 32
    input_dim = 16
    num_layers = 2
    time_dim = 8          # sequence length T
    minibatch_size = 2    # batch B

    key = jax.random.PRNGKey(0)
    key, kx = jax.random.split(key)

    # batch_first=False: input is (T, B, D)
    x = jax.random.normal(kx, (time_dim, minibatch_size, input_dim), jnp.float32)
    params = make_params(key, input_dim, hidden_dim, num_layers)

    # One-time packing of the LSTM weights (kept out of the per-call path).
    packed = prepack_lstm_params(params)
    packed = jax.block_until_ready(packed)

    fwd = jax.jit(lambda xx, pp: lstm_predictor_forward(
        xx, pp, num_layers=num_layers, hidden_dim=hidden_dim))

    out = fwd(x, packed)
    out = jax.block_until_ready(out)

    ref = _forward_ref(x, params)
    assert out.shape == (minibatch_size, hidden_dim)
    assert jnp.allclose(out, ref, atol=1e-5, rtol=1e-5), "mismatch vs reference"

    print("KERNEL_OK")
</pallas_src>

<mosaic_0001>
module attributes {stable_mosaic.version = 11 : i64} {
  func.func @kernel(%arg0: memref<64x16xf32, #tpu.memory_space<vmem>>, %arg1: memref<16x128xf32, #tpu.memory_space<vmem>>, %arg2: memref<1x128xf32, #tpu.memory_space<vmem>>, %arg3: memref<32x256xf32, #tpu.memory_space<vmem>>, %arg4: memref<32x128xf32, #tpu.memory_space<vmem>>, %arg5: memref<1x128xf32, #tpu.memory_space<vmem>>, %arg6: memref<2x32xf32, #tpu.memory_space<vmem>>) attributes {dimension_semantics = [], scalar_prefetch = 0 : i64, scratch_operands = 0 : i64, tpu.core_type = #tpu.core_type<tc>} {
    %c0 = arith.constant 0 : index
    %c0_0 = arith.constant 0 : index
    %0 = vector.load %arg1[%c0, %c0_0] : memref<16x128xf32, #tpu.memory_space<vmem>>, vector<16x128xf32>
    %c0_1 = arith.constant 0 : index
    %c0_2 = arith.constant 0 : index
    %1 = vector.load %arg2[%c0_1, %c0_2] : memref<1x128xf32, #tpu.memory_space<vmem>>, vector<1x128xf32>
    %c0_3 = arith.constant 0 : index
    %c0_4 = arith.constant 0 : index
    %2 = vector.load %arg3[%c0_3, %c0_4] : memref<32x256xf32, #tpu.memory_space<vmem>>, vector<32x256xf32>
    %c0_5 = arith.constant 0 : index
    %c0_6 = arith.constant 0 : index
    %3 = vector.load %arg4[%c0_5, %c0_6] : memref<32x128xf32, #tpu.memory_space<vmem>>, vector<32x128xf32>
    %c0_7 = arith.constant 0 : index
    %c0_8 = arith.constant 0 : index
    %4 = vector.load %arg5[%c0_7, %c0_8] : memref<1x128xf32, #tpu.memory_space<vmem>>, vector<1x128xf32>
    %c0_9 = arith.constant 0 : index
    %c0_10 = arith.constant 0 : index
    %5 = vector.load %arg0[%c0_9, %c0_10] : memref<64x16xf32, #tpu.memory_space<vmem>>, vector<64x16xf32>
    %cst = arith.constant dense<0.000000e+00> : vector<64x128xf32>
    %6 = tpu.matmul %5, %0, %cst {dimension_numbers = #tpu.dot_dimension_numbers<[1], [0], [0], [1], [0, 0, 1, 1], [], []>} : vector<64x16xf32>, vector<16x128xf32>, vector<64x128xf32> -> vector<64x128xf32>
    %7 = vector.broadcast %1 : vector<1x128xf32> to vector<64x128xf32>
    %8 = arith.addf %6, %7 : vector<64x128xf32>
    %9 = tpu.iota {dimensions = array<i32: 1>} : vector<8x128xi32>
    %c64_i32 = arith.constant 64 : i32
    %10 = vector.broadcast %c64_i32 : i32 to vector<8x128xi32>
    %11 = arith.cmpi sge, %9, %10 : vector<8x128xi32>
    %c96_i32 = arith.constant 96 : i32
    %12 = vector.broadcast %c96_i32 : i32 to vector<8x128xi32>
    %13 = arith.cmpi slt, %9, %12 : vector<8x128xi32>
    %14 = arith.andi %11, %13 : vector<8x128xi1>
    %cst_11 = arith.constant 0.000000e+00 : f32
    %15 = vector.broadcast %cst_11 : f32 to vector<8x32xf32>
    %16 = vector.extract_strided_slice %8 {offsets = [0, 0], sizes = [8, 128], strides = [1, 1]} : vector<64x128xf32> to vector<8x128xf32>
    %17 = arith.negf %16 : vector<8x128xf32>
    %18 = math.exp %17 : vector<8x128xf32>
    %cst_12 = arith.constant 1.000000e+00 : f32
    %19 = vector.broadcast %cst_12 : f32 to vector<8x128xf32>
    %20 = arith.addf %19, %18 : vector<8x128xf32>
    %21 = arith.divf %19, %20 : vector<8x128xf32>
    %22 = math.tanh %16 : vector<8x128xf32>
    %23 = arith.select %14, %22, %21 : vector<8x128xi1>, vector<8x128xf32>
    %24 = vector.extract_strided_slice %23 {offsets = [0, 0], sizes = [8, 32], strides = [1, 1]} : vector<8x128xf32> to vector<8x32xf32>
    %25 = vector.extract_strided_slice %23 {offsets = [0, 32], sizes = [8, 32], strides = [1, 1]} : vector<8x128xf32> to vector<8x32xf32>
    %26 = vector.extract_strided_slice %23 {offsets = [0, 64], sizes = [8, 32], strides = [1, 1]} : vector<8x128xf32> to vector<8x32xf32>
    %27 = vector.extract_strided_slice %23 {offsets = [0, 96], sizes = [8, 32], strides = [1, 1]} : vector<8x128xf32> to vector<8x32xf32>
    %28 = arith.mulf %25, %15 : vector<8x32xf32>
    %29 = arith.mulf %24, %26 : vector<8x32xf32>
    %30 = arith.addf %28, %29 : vector<8x32xf32>
    %31 = math.tanh %30 : vector<8x32xf32>
    %32 = arith.mulf %27, %31 : vector<8x32xf32>
    %cst_13 = arith.constant dense<0.000000e+00> : vector<8x256xf32>
    %33 = tpu.matmul %32, %2, %cst_13 {dimension_numbers = #tpu.dot_dimension_numbers<[1], [0], [0], [1], [0, 0, 1, 1], [], []>} : vector<8x32xf32>, vector<32x256xf32>, vector<8x256xf32> -> vector<8x256xf32>
    %34 = vector.extract_strided_slice %8 {offsets = [8, 0], sizes = [8, 128], strides = [1, 1]} : vector<64x128xf32> to vector<8x128xf32>
    %35 = vector.extract_strided_slice %33 {offsets = [0, 0], sizes = [8, 128], strides = [1, 1]} : vector<8x256xf32> to vector<8x128xf32>
    %36 = arith.addf %34, %35 : vector<8x128xf32>
    %37 = arith.negf %36 : vector<8x128xf32>
    %38 = math.exp %37 : vector<8x128xf32>
    %cst_14 = arith.constant 1.000000e+00 : f32
    %39 = vector.broadcast %cst_14 : f32 to vector<8x128xf32>
    %40 = arith.addf %39, %38 : vector<8x128xf32>
    %41 = arith.divf %39, %40 : vector<8x128xf32>
    %42 = math.tanh %36 : vector<8x128xf32>
    %43 = arith.select %14, %42, %41 : vector<8x128xi1>, vector<8x128xf32>
    %44 = vector.extract_strided_slice %43 {offsets = [0, 0], sizes = [8, 32], strides = [1, 1]} : vector<8x128xf32> to vector<8x32xf32>
    %45 = vector.extract_strided_slice %43 {offsets = [0, 32], sizes = [8, 32], strides = [1, 1]} : vector<8x128xf32> to vector<8x32xf32>
    %46 = vector.extract_strided_slice %43 {offsets = [0, 64], sizes = [8, 32], strides = [1, 1]} : vector<8x128xf32> to vector<8x32xf32>
    %47 = vector.extract_strided_slice %43 {offsets = [0, 96], sizes = [8, 32], strides = [1, 1]} : vector<8x128xf32> to vector<8x32xf32>
    %48 = arith.mulf %45, %30 : vector<8x32xf32>
    %49 = arith.mulf %44, %46 : vector<8x32xf32>
    %50 = arith.addf %48, %49 : vector<8x32xf32>
    %51 = math.tanh %50 : vector<8x32xf32>
    %52 = arith.mulf %47, %51 : vector<8x32xf32>
    %53 = vector.extract_strided_slice %33 {offsets = [0, 128], sizes = [8, 128], strides = [1, 1]} : vector<8x256xf32> to vector<8x128xf32>
    %54 = vector.broadcast %4 : vector<1x128xf32> to vector<8x128xf32>
    %55 = arith.addf %53, %54 : vector<8x128xf32>
    %56 = arith.negf %55 : vector<8x128xf32>
    %57 = math.exp %56 : vector<8x128xf32>
    %cst_15 = arith.constant 1.000000e+00 : f32
    %58 = vector.broadcast %cst_15 : f32 to vector<8x128xf32>
    %59 = arith.addf %58, %57 : vector<8x128xf32>
    %60 = arith.divf %58, %59 : vector<8x128xf32>
    %61 = math.tanh %55 : vector<8x128xf32>
    %62 = arith.select %14, %61, %60 : vector<8x128xi1>, vector<8x128xf32>
    %63 = vector.extract_strided_slice %62 {offsets = [0, 0], sizes = [8, 32], strides = [1, 1]} : vector<8x128xf32> to vector<8x32xf32>
    %64 = vector.extract_strided_slice %62 {offsets = [0, 32], sizes = [8, 32], strides = [1, 1]} : vector<8x128xf32> to vector<8x32xf32>
    %65 = vector.extract_strided_slice %62 {offsets = [0, 64], sizes = [8, 32], strides = [1, 1]} : vector<8x128xf32> to vector<8x32xf32>
    %66 = vector.extract_strided_slice %62 {offsets = [0, 96], sizes = [8, 32], strides = [1, 1]} : vector<8x128xf32> to vector<8x32xf32>
    %67 = arith.mulf %64, %15 : vector<8x32xf32>
    %68 = arith.mulf %63, %65 : vector<8x32xf32>
    %69 = arith.addf %67, %68 : vector<8x32xf32>
    %70 = math.tanh %69 : vector<8x32xf32>
    %71 = arith.mulf %66, %70 : vector<8x32xf32>
    %cst_16 = arith.constant dense<0.000000e+00> : vector<8x256xf32>
    %72 = tpu.matmul %52, %2, %cst_16 {dimension_numbers = #tpu.dot_dimension_numbers<[1], [0], [0], [1], [0, 0, 1, 1], [], []>} : vector<8x32xf32>, vector<32x256xf32>, vector<8x256xf32> -> vector<8x256xf32>
    %cst_17 = arith.constant dense<0.000000e+00> : vector<8x128xf32>
    %73 = tpu.matmul %71, %3, %cst_17 {dimension_numbers = #tpu.dot_dimension_numbers<[1], [0], [0], [1], [0, 0, 1, 1], [], []>} : vector<8x32xf32>, vector<32x128xf32>, vector<8x128xf32> -> vector<8x128xf32>
    %74 = vector.extract_strided_slice %8 {offsets = [16, 0], sizes = [8, 128], strides = [1, 1]} : vector<64x128xf32> to vector<8x128xf32>
    %75 = vector.extract_strided_slice %72 {offsets = [0, 0], sizes = [8, 128], strides = [1, 1]} : vector<8x256xf32> to vector<8x128xf32>
    %76 = arith.addf %74, %75 : vector<8x128xf32>
    %77 = arith.negf %76 : vector<8x128xf32>
    %78 = math.exp %77 : vector<8x128xf32>
    %cst_18 = arith.constant 1.000000e+00 : f32
    %79 = vector.broadcast %cst_18 : f32 to vector<8x128xf32>
    %80 = arith.addf %79, %78 : vector<8x128xf32>
    %81 = arith.divf %79, %80 : vector<8x128xf32>
    %82 = math.tanh %76 : vector<8x128xf32>
    %83 = arith.select %14, %82, %81 : vector<8x128xi1>, vector<8x128xf32>
    %84 = vector.extract_strided_slice %83 {offsets = [0, 0], sizes = [8, 32], strides = [1, 1]} : vector<8x128xf32> to vector<8x32xf32>
    %85 = vector.extract_strided_slice %83 {offsets = [0, 32], sizes = [8, 32], strides = [1, 1]} : vector<8x128xf32> to vector<8x32xf32>
    %86 = vector.extract_strided_slice %83 {offsets = [0, 64], sizes = [8, 32], strides = [1, 1]} : vector<8x128xf32> to vector<8x32xf32>
    %87 = vector.extract_strided_slice %83 {offsets = [0, 96], sizes = [8, 32], strides = [1, 1]} : vector<8x128xf32> to vector<8x32xf32>
    %88 = arith.mulf %85, %50 : vector<8x32xf32>
    %89 = arith.mulf %84, %86 : vector<8x32xf32>
    %90 = arith.addf %88, %89 : vector<8x32xf32>
    %91 = math.tanh %90 : vector<8x32xf32>
    %92 = arith.mulf %87, %91 : vector<8x32xf32>
    %93 = vector.extract_strided_slice %72 {offsets = [0, 128], sizes = [8, 128], strides = [1, 1]} : vector<8x256xf32> to vector<8x128xf32>
    %94 = vector.broadcast %4 : vector<1x128xf32> to vector<8x128xf32>
    %95 = arith.addf %93, %94 : vector<8x128xf32>
    %96 = arith.addf %95, %73 : vector<8x128xf32>
    %97 = arith.negf %96 : vector<8x128xf32>
    %98 = math.exp %97 : vector<8x128xf32>
    %cst_19 = arith.constant 1.000000e+00 : f32
    %99 = vector.broadcast %cst_19 : f32 to vector<8x128xf32>
    %100 = arith.addf %99, %98 : vector<8x128xf32>
    %101 = arith.divf %99, %100 : vector<8x128xf32>
    %102 = math.tanh %96 : vector<8x128xf32>
    %103 = arith.select %14, %102, %101 : vector<8x128xi1>, vector<8x128xf32>
    %104 = vector.extract_strided_slice %103 {offsets = [0, 0], sizes = [8, 32], strides = [1, 1]} : vector<8x128xf32> to vector<8x32xf32>
    %105 = vector.extract_strided_slice %103 {offsets = [0, 32], sizes = [8, 32], strides = [1, 1]} : vector<8x128xf32> to vector<8x32xf32>
    %106 = vector.extract_strided_slice %103 {offsets = [0, 64], sizes = [8, 32], strides = [1, 1]} : vector<8x128xf32> to vector<8x32xf32>
    %107 = vector.extract_strided_slice %103 {offsets = [0, 96], sizes = [8, 32], strides = [1, 1]} : vector<8x128xf32> to vector<8x32xf32>
    %108 = arith.mulf %105, %69 : vector<8x32xf32>
    %109 = arith.mulf %104, %106 : vector<8x32xf32>
    %110 = arith.addf %108, %109 : vector<8x32xf32>
    %111 = math.tanh %110 : vector<8x32xf32>
    %112 = arith.mulf %107, %111 : vector<8x32xf32>
    %cst_20 = arith.constant dense<0.000000e+00> : vector<8x256xf32>
    %113 = tpu.matmul %92, %2, %cst_20 {dimension_numbers = #tpu.dot_dimension_numbers<[1], [0], [0], [1], [0, 0, 1, 1], [], []>} : vector<8x32xf32>, vector<32x256xf32>, vector<8x256xf32> -> vector<8x256xf32>
    %cst_21 = arith.constant dense<0.000000e+00> : vector<8x128xf32>
    %114 = tpu.matmul %112, %3, %cst_21 {dimension_numbers = #tpu.dot_dimension_numbers<[1], [0], [0], [1], [0, 0, 1, 1], [], []>} : vector<8x32xf32>, vector<32x128xf32>, vector<8x128xf32> -> vector<8x128xf32>
    %115 = vector.extract_strided_slice %8 {offsets = [24, 0], sizes = [8, 128], strides = [1, 1]} : vector<64x128xf32> to vector<8x128xf32>
    %116 = vector.extract_strided_slice %113 {offsets = [0, 0], sizes = [8, 128], strides = [1, 1]} : vector<8x256xf32> to vector<8x128xf32>
    %117 = arith.addf %115, %116 : vector<8x128xf32>
    %118 = arith.negf %117 : vector<8x128xf32>
    %119 = math.exp %118 : vector<8x128xf32>
    %cst_22 = arith.constant 1.000000e+00 : f32
    %120 = vector.broadcast %cst_22 : f32 to vector<8x128xf32>
    %121 = arith.addf %120, %119 : vector<8x128xf32>
    %122 = arith.divf %120, %121 : vector<8x128xf32>
    %123 = math.tanh %117 : vector<8x128xf32>
    %124 = arith.select %14, %123, %122 : vector<8x128xi1>, vector<8x128xf32>
    %125 = vector.extract_strided_slice %124 {offsets = [0, 0], sizes = [8, 32], strides = [1, 1]} : vector<8x128xf32> to vector<8x32xf32>
    %126 = vector.extract_strided_slice %124 {offsets = [0, 32], sizes = [8, 32], strides = [1, 1]} : vector<8x128xf32> to vector<8x32xf32>
    %127 = vector.extract_strided_slice %124 {offsets = [0, 64], sizes = [8, 32], strides = [1, 1]} : vector<8x128xf32> to vector<8x32xf32>
    %128 = vector.extract_strided_slice %124 {offsets = [0, 96], sizes = [8, 32], strides = [1, 1]} : vector<8x128xf32> to vector<8x32xf32>
    %129 = arith.mulf %126, %90 : vector<8x32xf32>
    %130 = arith.mulf %125, %127 : vector<8x32xf32>
    %131 = arith.addf %129, %130 : vector<8x32xf32>
    %132 = math.tanh %131 : vector<8x32xf32>
    %133 = arith.mulf %128, %132 : vector<8x32xf32>
    %134 = vector.extract_strided_slice %113 {offsets = [0, 128], sizes = [8, 128], strides = [1, 1]} : vector<8x256xf32> to vector<8x128xf32>
    %135 = vector.broadcast %4 : vector<1x128xf32> to vector<8x128xf32>
    %136 = arith.addf %134, %135 : vector<8x128xf32>
    %137 = arith.addf %136, %114 : vector<8x128xf32>
    %138 = arith.negf %137 : vector<8x128xf32>
    %139 = math.exp %138 : vector<8x128xf32>
    %cst_23 = arith.constant 1.000000e+00 : f32
    %140 = vector.broadcast %cst_23 : f32 to vector<8x128xf32>
    %141 = arith.addf %140, %139 : vector<8x128xf32>
    %142 = arith.divf %140, %141 : vector<8x128xf32>
    %143 = math.tanh %137 : vector<8x128xf32>
    %144 = arith.select %14, %143, %142 : vector<8x128xi1>, vector<8x128xf32>
    %145 = vector.extract_strided_slice %144 {offsets = [0, 0], sizes = [8, 32], strides = [1, 1]} : vector<8x128xf32> to vector<8x32xf32>
    %146 = vector.extract_strided_slice %144 {offsets = [0, 32], sizes = [8, 32], strides = [1, 1]} : vector<8x128xf32> to vector<8x32xf32>
    %147 = vector.extract_strided_slice %144 {offsets = [0, 64], sizes = [8, 32], strides = [1, 1]} : vector<8x128xf32> to vector<8x32xf32>
    %148 = vector.extract_strided_slice %144 {offsets = [0, 96], sizes = [8, 32], strides = [1, 1]} : vector<8x128xf32> to vector<8x32xf32>
    %149 = arith.mulf %146, %110 : vector<8x32xf32>
    %150 = arith.mulf %145, %147 : vector<8x32xf32>
    %151 = arith.addf %149, %150 : vector<8x32xf32>
    %152 = math.tanh %151 : vector<8x32xf32>
    %153 = arith.mulf %148, %152 : vector<8x32xf32>
    %cst_24 = arith.constant dense<0.000000e+00> : vector<8x256xf32>
    %154 = tpu.matmul %133, %2, %cst_24 {dimension_numbers = #tpu.dot_dimension_numbers<[1], [0], [0], [1], [0, 0, 1, 1], [], []>} : vector<8x32xf32>, vector<32x256xf32>, vector<8x256xf32> -> vector<8x256xf32>
    %cst_25 = arith.constant dense<0.000000e+00> : vector<8x128xf32>
    %155 = tpu.matmul %153, %3, %cst_25 {dimension_numbers = #tpu.dot_dimension_numbers<[1], [0], [0], [1], [0, 0, 1, 1], [], []>} : vector<8x32xf32>, vector<32x128xf32>, vector<8x128xf32> -> vector<8x128xf32>
    %156 = vector.extract_strided_slice %8 {offsets = [32, 0], sizes = [8, 128], strides = [1, 1]} : vector<64x128xf32> to vector<8x128xf32>
    %157 = vector.extract_strided_slice %154 {offsets = [0, 0], sizes = [8, 128], strides = [1, 1]} : vector<8x256xf32> to vector<8x128xf32>
    %158 = arith.addf %156, %157 : vector<8x128xf32>
    %159 = arith.negf %158 : vector<8x128xf32>
    %160 = math.exp %159 : vector<8x128xf32>
    %cst_26 = arith.constant 1.000000e+00 : f32
    %161 = vector.broadcast %cst_26 : f32 to vector<8x128xf32>
    %162 = arith.addf %161, %160 : vector<8x128xf32>
    %163 = arith.divf %161, %162 : vector<8x128xf32>
    %164 = math.tanh %158 : vector<8x128xf32>
    %165 = arith.select %14, %164, %163 : vector<8x128xi1>, vector<8x128xf32>
    %166 = vector.extract_strided_slice %165 {offsets = [0, 0], sizes = [8, 32], strides = [1, 1]} : vector<8x128xf32> to vector<8x32xf32>
    %167 = vector.extract_strided_slice %165 {offsets = [0, 32], sizes = [8, 32], strides = [1, 1]} : vector<8x128xf32> to vector<8x32xf32>
    %168 = vector.extract_strided_slice %165 {offsets = [0, 64], sizes = [8, 32], strides = [1, 1]} : vector<8x128xf32> to vector<8x32xf32>
    %169 = vector.extract_strided_slice %165 {offsets = [0, 96], sizes = [8, 32], strides = [1, 1]} : vector<8x128xf32> to vector<8x32xf32>
    %170 = arith.mulf %167, %131 : vector<8x32xf32>
    %171 = arith.mulf %166, %168 : vector<8x32xf32>
    %172 = arith.addf %170, %171 : vector<8x32xf32>
    %173 = math.tanh %172 : vector<8x32xf32>
    %174 = arith.mulf %169, %173 : vector<8x32xf32>
    %175 = vector.extract_strided_slice %154 {offsets = [0, 128], sizes = [8, 128], strides = [1, 1]} : vector<8x256xf32> to vector<8x128xf32>
    %176 = vector.broadcast %4 : vector<1x128xf32> to vector<8x128xf32>
    %177 = arith.addf %175, %176 : vector<8x128xf32>
    %178 = arith.addf %177, %155 : vector<8x128xf32>
    %179 = arith.negf %178 : vector<8x128xf32>
    %180 = math.exp %179 : vector<8x128xf32>
    %cst_27 = arith.constant 1.000000e+00 : f32
    %181 = vector.broadcast %cst_27 : f32 to vector<8x128xf32>
    %182 = arith.addf %181, %180 : vector<8x128xf32>
    %183 = arith.divf %181, %182 : vector<8x128xf32>
    %184 = math.tanh %178 : vector<8x128xf32>
    %185 = arith.select %14, %184, %183 : vector<8x128xi1>, vector<8x128xf32>
    %186 = vector.extract_strided_slice %185 {offsets = [0, 0], sizes = [8, 32], strides = [1, 1]} : vector<8x128xf32> to vector<8x32xf32>
    %187 = vector.extract_strided_slice %185 {offsets = [0, 32], sizes = [8, 32], strides = [1, 1]} : vector<8x128xf32> to vector<8x32xf32>
    %188 = vector.extract_strided_slice %185 {offsets = [0, 64], sizes = [8, 32], strides = [1, 1]} : vector<8x128xf32> to vector<8x32xf32>
    %189 = vector.extract_strided_slice %185 {offsets = [0, 96], sizes = [8, 32], strides = [1, 1]} : vector<8x128xf32> to vector<8x32xf32>
    %190 = arith.mulf %187, %151 : vector<8x32xf32>
    %191 = arith.mulf %186, %188 : vector<8x32xf32>
    %192 = arith.addf %190, %191 : vector<8x32xf32>
    %193 = math.tanh %192 : vector<8x32xf32>
    %194 = arith.mulf %189, %193 : vector<8x32xf32>
    %cst_28 = arith.constant dense<0.000000e+00> : vector<8x256xf32>
    %195 = tpu.matmul %174, %2, %cst_28 {dimension_numbers = #tpu.dot_dimension_numbers<[1], [0], [0], [1], [0, 0, 1, 1], [], []>} : vector<8x32xf32>, vector<32x256xf32>, vector<8x256xf32> -> vector<8x256xf32>
    %cst_29 = arith.constant dense<0.000000e+00> : vector<8x128xf32>
    %196 = tpu.matmul %194, %3, %cst_29 {dimension_numbers = #tpu.dot_dimension_numbers<[1], [0], [0], [1], [0, 0, 1, 1], [], []>} : vector<8x32xf32>, vector<32x128xf32>, vector<8x128xf32> -> vector<8x128xf32>
    %197 = vector.extract_strided_slice %8 {offsets = [40, 0], sizes = [8, 128], strides = [1, 1]} : vector<64x128xf32> to vector<8x128xf32>
    %198 = vector.extract_strided_slice %195 {offsets = [0, 0], sizes = [8, 128], strides = [1, 1]} : vector<8x256xf32> to vector<8x128xf32>
    %199 = arith.addf %197, %198 : vector<8x128xf32>
    %200 = arith.negf %199 : vector<8x128xf32>
    %201 = math.exp %200 : vector<8x128xf32>
    %cst_30 = arith.constant 1.000000e+00 : f32
    %202 = vector.broadcast %cst_30 : f32 to vector<8x128xf32>
    %203 = arith.addf %202, %201 : vector<8x128xf32>
    %204 = arith.divf %202, %203 : vector<8x128xf32>
    %205 = math.tanh %199 : vector<8x128xf32>
    %206 = arith.select %14, %205, %204 : vector<8x128xi1>, vector<8x128xf32>
    %207 = vector.extract_strided_slice %206 {offsets = [0, 0], sizes = [8, 32], strides = [1, 1]} : vector<8x128xf32> to vector<8x32xf32>
    %208 = vector.extract_strided_slice %206 {offsets = [0, 32], sizes = [8, 32], strides = [1, 1]} : vector<8x128xf32> to vector<8x32xf32>
    %209 = vector.extract_strided_slice %206 {offsets = [0, 64], sizes = [8, 32], strides = [1, 1]} : vector<8x128xf32> to vector<8x32xf32>
    %210 = vector.extract_strided_slice %206 {offsets = [0, 96], sizes = [8, 32], strides = [1, 1]} : vector<8x128xf32> to vector<8x32xf32>
    %211 = arith.mulf %208, %172 : vector<8x32xf32>
    %212 = arith.mulf %207, %209 : vector<8x32xf32>
    %213 = arith.addf %211, %212 : vector<8x32xf32>
    %214 = math.tanh %213 : vector<8x32xf32>
    %215 = arith.mulf %210, %214 : vector<8x32xf32>
    %216 = vector.extract_strided_slice %195 {offsets = [0, 128], sizes = [8, 128], strides = [1, 1]} : vector<8x256xf32> to vector<8x128xf32>
    %217 = vector.broadcast %4 : vector<1x128xf32> to vector<8x128xf32>
    %218 = arith.addf %216, %217 : vector<8x128xf32>
    %219 = arith.addf %218, %196 : vector<8x128xf32>
    %220 = arith.negf %219 : vector<8x128xf32>
    %221 = math.exp %220 : vector<8x128xf32>
    %cst_31 = arith.constant 1.000000e+00 : f32
    %222 = vector.broadcast %cst_31 : f32 to vector<8x128xf32>
    %223 = arith.addf %222, %221 : vector<8x128xf32>
    %224 = arith.divf %222, %223 : vector<8x128xf32>
    %225 = math.tanh %219 : vector<8x128xf32>
    %226 = arith.select %14, %225, %224 : vector<8x128xi1>, vector<8x128xf32>
    %227 = vector.extract_strided_slice %226 {offsets = [0, 0], sizes = [8, 32], strides = [1, 1]} : vector<8x128xf32> to vector<8x32xf32>
    %228 = vector.extract_strided_slice %226 {offsets = [0, 32], sizes = [8, 32], strides = [1, 1]} : vector<8x128xf32> to vector<8x32xf32>
    %229 = vector.extract_strided_slice %226 {offsets = [0, 64], sizes = [8, 32], strides = [1, 1]} : vector<8x128xf32> to vector<8x32xf32>
    %230 = vector.extract_strided_slice %226 {offsets = [0, 96], sizes = [8, 32], strides = [1, 1]} : vector<8x128xf32> to vector<8x32xf32>
    %231 = arith.mulf %228, %192 : vector<8x32xf32>
    %232 = arith.mulf %227, %229 : vector<8x32xf32>
    %233 = arith.addf %231, %232 : vector<8x32xf32>
    %234 = math.tanh %233 : vector<8x32xf32>
    %235 = arith.mulf %230, %234 : vector<8x32xf32>
    %cst_32 = arith.constant dense<0.000000e+00> : vector<8x256xf32>
    %236 = tpu.matmul %215, %2, %cst_32 {dimension_numbers = #tpu.dot_dimension_numbers<[1], [0], [0], [1], [0, 0, 1, 1], [], []>} : vector<8x32xf32>, vector<32x256xf32>, vector<8x256xf32> -> vector<8x256xf32>
    %cst_33 = arith.constant dense<0.000000e+00> : vector<8x128xf32>
    %237 = tpu.matmul %235, %3, %cst_33 {dimension_numbers = #tpu.dot_dimension_numbers<[1], [0], [0], [1], [0, 0, 1, 1], [], []>} : vector<8x32xf32>, vector<32x128xf32>, vector<8x128xf32> -> vector<8x128xf32>
    %238 = vector.extract_strided_slice %8 {offsets = [48, 0], sizes = [8, 128], strides = [1, 1]} : vector<64x128xf32> to vector<8x128xf32>
    %239 = vector.extract_strided_slice %236 {offsets = [0, 0], sizes = [8, 128], strides = [1, 1]} : vector<8x256xf32> to vector<8x128xf32>
    %240 = arith.addf %238, %239 : vector<8x128xf32>
    %241 = arith.negf %240 : vector<8x128xf32>
    %242 = math.exp %241 : vector<8x128xf32>
    %cst_34 = arith.constant 1.000000e+00 : f32
    %243 = vector.broadcast %cst_34 : f32 to vector<8x128xf32>
    %244 = arith.addf %243, %242 : vector<8x128xf32>
    %245 = arith.divf %243, %244 : vector<8x128xf32>
    %246 = math.tanh %240 : vector<8x128xf32>
    %247 = arith.select %14, %246, %245 : vector<8x128xi1>, vector<8x128xf32>
    %248 = vector.extract_strided_slice %247 {offsets = [0, 0], sizes = [8, 32], strides = [1, 1]} : vector<8x128xf32> to vector<8x32xf32>
    %249 = vector.extract_strided_slice %247 {offsets = [0, 32], sizes = [8, 32], strides = [1, 1]} : vector<8x128xf32> to vector<8x32xf32>
    %250 = vector.extract_strided_slice %247 {offsets = [0, 64], sizes = [8, 32], strides = [1, 1]} : vector<8x128xf32> to vector<8x32xf32>
    %251 = vector.extract_strided_slice %247 {offsets = [0, 96], sizes = [8, 32], strides = [1, 1]} : vector<8x128xf32> to vector<8x32xf32>
    %252 = arith.mulf %249, %213 : vector<8x32xf32>
    %253 = arith.mulf %248, %250 : vector<8x32xf32>
    %254 = arith.addf %252, %253 : vector<8x32xf32>
    %255 = math.tanh %254 : vector<8x32xf32>
    %256 = arith.mulf %251, %255 : vector<8x32xf32>
    %257 = vector.extract_strided_slice %236 {offsets = [0, 128], sizes = [8, 128], strides = [1, 1]} : vector<8x256xf32> to vector<8x128xf32>
    %258 = vector.broadcast %4 : vector<1x128xf32> to vector<8x128xf32>
    %259 = arith.addf %257, %258 : vector<8x128xf32>
    %260 = arith.addf %259, %237 : vector<8x128xf32>
    %261 = arith.negf %260 : vector<8x128xf32>
    %262 = math.exp %261 : vector<8x128xf32>
    %cst_35 = arith.constant 1.000000e+00 : f32
    %263 = vector.broadcast %cst_35 : f32 to vector<8x128xf32>
    %264 = arith.addf %263, %262 : vector<8x128xf32>
    %265 = arith.divf %263, %264 : vector<8x128xf32>
    %266 = math.tanh %260 : vector<8x128xf32>
    %267 = arith.select %14, %266, %265 : vector<8x128xi1>, vector<8x128xf32>
    %268 = vector.extract_strided_slice %267 {offsets = [0, 0], sizes = [8, 32], strides = [1, 1]} : vector<8x128xf32> to vector<8x32xf32>
    %269 = vector.extract_strided_slice %267 {offsets = [0, 32], sizes = [8, 32], strides = [1, 1]} : vector<8x128xf32> to vector<8x32xf32>
    %270 = vector.extract_strided_slice %267 {offsets = [0, 64], sizes = [8, 32], strides = [1, 1]} : vector<8x128xf32> to vector<8x32xf32>
    %271 = vector.extract_strided_slice %267 {offsets = [0, 96], sizes = [8, 32], strides = [1, 1]} : vector<8x128xf32> to vector<8x32xf32>
    %272 = arith.mulf %269, %233 : vector<8x32xf32>
    %273 = arith.mulf %268, %270 : vector<8x32xf32>
    %274 = arith.addf %272, %273 : vector<8x32xf32>
    %275 = math.tanh %274 : vector<8x32xf32>
    %276 = arith.mulf %271, %275 : vector<8x32xf32>
    %cst_36 = arith.constant dense<0.000000e+00> : vector<8x256xf32>
    %277 = tpu.matmul %256, %2, %cst_36 {dimension_numbers = #tpu.dot_dimension_numbers<[1], [0], [0], [1], [0, 0, 1, 1], [], []>} : vector<8x32xf32>, vector<32x256xf32>, vector<8x256xf32> -> vector<8x256xf32>
    %cst_37 = arith.constant dense<0.000000e+00> : vector<8x128xf32>
    %278 = tpu.matmul %276, %3, %cst_37 {dimension_numbers = #tpu.dot_dimension_numbers<[1], [0], [0], [1], [0, 0, 1, 1], [], []>} : vector<8x32xf32>, vector<32x128xf32>, vector<8x128xf32> -> vector<8x128xf32>
    %279 = vector.extract_strided_slice %8 {offsets = [56, 0], sizes = [8, 128], strides = [1, 1]} : vector<64x128xf32> to vector<8x128xf32>
    %280 = vector.extract_strided_slice %277 {offsets = [0, 0], sizes = [8, 128], strides = [1, 1]} : vector<8x256xf32> to vector<8x128xf32>
    %281 = arith.addf %279, %280 : vector<8x128xf32>
    %282 = arith.negf %281 : vector<8x128xf32>
    %283 = math.exp %282 : vector<8x128xf32>
    %cst_38 = arith.constant 1.000000e+00 : f32
    %284 = vector.broadcast %cst_38 : f32 to vector<8x128xf32>
    %285 = arith.addf %284, %283 : vector<8x128xf32>
    %286 = arith.divf %284, %285 : vector<8x128xf32>
    %287 = math.tanh %281 : vector<8x128xf32>
    %288 = arith.select %14, %287, %286 : vector<8x128xi1>, vector<8x128xf32>
    %289 = vector.extract_strided_slice %288 {offsets = [0, 0], sizes = [8, 32], strides = [1, 1]} : vector<8x128xf32> to vector<8x32xf32>
    %290 = vector.extract_strided_slice %288 {offsets = [0, 32], sizes = [8, 32], strides = [1, 1]} : vector<8x128xf32> to vector<8x32xf32>
    %291 = vector.extract_strided_slice %288 {offsets = [0, 64], sizes = [8, 32], strides = [1, 1]} : vector<8x128xf32> to vector<8x32xf32>
    %292 = vector.extract_strided_slice %288 {offsets = [0, 96], sizes = [8, 32], strides = [1, 1]} : vector<8x128xf32> to vector<8x32xf32>
    %293 = arith.mulf %290, %254 : vector<8x32xf32>
    %294 = arith.mulf %289, %291 : vector<8x32xf32>
    %295 = arith.addf %293, %294 : vector<8x32xf32>
    %296 = math.tanh %295 : vector<8x32xf32>
    %297 = arith.mulf %292, %296 : vector<8x32xf32>
    %298 = vector.extract_strided_slice %277 {offsets = [0, 128], sizes = [8, 128], strides = [1, 1]} : vector<8x256xf32> to vector<8x128xf32>
    %299 = vector.broadcast %4 : vector<1x128xf32> to vector<8x128xf32>
    %300 = arith.addf %298, %299 : vector<8x128xf32>
    %301 = arith.addf %300, %278 : vector<8x128xf32>
    %302 = arith.negf %301 : vector<8x128xf32>
    %303 = math.exp %302 : vector<8x128xf32>
    %cst_39 = arith.constant 1.000000e+00 : f32
    %304 = vector.broadcast %cst_39 : f32 to vector<8x128xf32>
    %305 = arith.addf %304, %303 : vector<8x128xf32>
    %306 = arith.divf %304, %305 : vector<8x128xf32>
    %307 = math.tanh %301 : vector<8x128xf32>
    %308 = arith.select %14, %307, %306 : vector<8x128xi1>, vector<8x128xf32>
    %309 = vector.extract_strided_slice %308 {offsets = [0, 0], sizes = [8, 32], strides = [1, 1]} : vector<8x128xf32> to vector<8x32xf32>
    %310 = vector.extract_strided_slice %308 {offsets = [0, 32], sizes = [8, 32], strides = [1, 1]} : vector<8x128xf32> to vector<8x32xf32>
    %311 = vector.extract_strided_slice %308 {offsets = [0, 64], sizes = [8, 32], strides = [1, 1]} : vector<8x128xf32> to vector<8x32xf32>
    %312 = vector.extract_strided_slice %308 {offsets = [0, 96], sizes = [8, 32], strides = [1, 1]} : vector<8x128xf32> to vector<8x32xf32>
    %313 = arith.mulf %310, %274 : vector<8x32xf32>
    %314 = arith.mulf %309, %311 : vector<8x32xf32>
    %315 = arith.addf %313, %314 : vector<8x32xf32>
    %316 = math.tanh %315 : vector<8x32xf32>
    %317 = arith.mulf %312, %316 : vector<8x32xf32>
    %cst_40 = arith.constant dense<0.000000e+00> : vector<8x256xf32>
    %318 = tpu.matmul %297, %2, %cst_40 {dimension_numbers = #tpu.dot_dimension_numbers<[1], [0], [0], [1], [0, 0, 1, 1], [], []>} : vector<8x32xf32>, vector<32x256xf32>, vector<8x256xf32> -> vector<8x256xf32>
    %cst_41 = arith.constant dense<0.000000e+00> : vector<8x128xf32>
    %319 = tpu.matmul %317, %3, %cst_41 {dimension_numbers = #tpu.dot_dimension_numbers<[1], [0], [0], [1], [0, 0, 1, 1], [], []>} : vector<8x32xf32>, vector<32x128xf32>, vector<8x128xf32> -> vector<8x128xf32>
    %320 = vector.extract_strided_slice %318 {offsets = [0, 128], sizes = [8, 128], strides = [1, 1]} : vector<8x256xf32> to vector<8x128xf32>
    %321 = vector.broadcast %4 : vector<1x128xf32> to vector<8x128xf32>
    %322 = arith.addf %320, %321 : vector<8x128xf32>
    %323 = arith.addf %322, %319 : vector<8x128xf32>
    %324 = arith.negf %323 : vector<8x128xf32>
    %325 = math.exp %324 : vector<8x128xf32>
    %cst_42 = arith.constant 1.000000e+00 : f32
    %326 = vector.broadcast %cst_42 : f32 to vector<8x128xf32>
    %327 = arith.addf %326, %325 : vector<8x128xf32>
    %328 = arith.divf %326, %327 : vector<8x128xf32>
    %329 = math.tanh %323 : vector<8x128xf32>
    %330 = arith.select %14, %329, %328 : vector<8x128xi1>, vector<8x128xf32>
    %331 = vector.extract_strided_slice %330 {offsets = [0, 0], sizes = [8, 32], strides = [1, 1]} : vector<8x128xf32> to vector<8x32xf32>
    %332 = vector.extract_strided_slice %330 {offsets = [0, 32], sizes = [8, 32], strides = [1, 1]} : vector<8x128xf32> to vector<8x32xf32>
    %333 = vector.extract_strided_slice %330 {offsets = [0, 64], sizes = [8, 32], strides = [1, 1]} : vector<8x128xf32> to vector<8x32xf32>
    %334 = vector.extract_strided_slice %330 {offsets = [0, 96], sizes = [8, 32], strides = [1, 1]} : vector<8x128xf32> to vector<8x32xf32>
    %335 = arith.mulf %332, %315 : vector<8x32xf32>
    %336 = arith.mulf %331, %333 : vector<8x32xf32>
    %337 = arith.addf %335, %336 : vector<8x32xf32>
    %338 = math.tanh %337 : vector<8x32xf32>
    %339 = arith.mulf %334, %338 : vector<8x32xf32>
    %340 = vector.extract_strided_slice %339 {offsets = [0, 0], sizes = [2, 32], strides = [1, 1]} : vector<8x32xf32> to vector<2x32xf32>
    %c0_43 = arith.constant 0 : index
    %c0_44 = arith.constant 0 : index
    %341 = vector.load %arg6[%c0_43, %c0_44] : memref<2x32xf32, #tpu.memory_space<vmem>>, vector<2x32xf32>
    tpu.vector_store %arg6[%c0_43, %c0_44], %340 {strides = array<i32>} : memref<2x32xf32, #tpu.memory_space<vmem>>, vector<2x32xf32>,
    return
  }
}

</mosaic_0001>

<llo_original>
// kernel: _lambda_.1
$region0: #{_lambda_.1}
  #allocation0 [shape = 'u32[]', space=smem, size = 0x4, offset = 0x4, fixed_abs, tag = 'smem constant byte address 0x4 - core index']
  #allocation1 [shape = 'u32[144,128]{1,0:T(1,128)}', space=vmem, size = 0x12000, scoped, tag = 'internal scratch']
  %s0 = inlined_call_operand.vmem [shape: f32[64,16], index: 0, kind: input, shape index: {}]
  %s1 = inlined_call_operand.vmem [shape: f32[16,128], index: 1, kind: input, shape index: {}]
  %s2 = inlined_call_operand.vmem [shape: f32[1,128], index: 2, kind: input, shape index: {}]
  %s3 = inlined_call_operand.vmem [shape: f32[32,256], index: 3, kind: input, shape index: {}]
  %s4 = inlined_call_operand.hbm [shape: f32[32,128], index: 4, kind: input, shape index: {}]
  %s5 = inlined_call_operand.vmem [shape: f32[1,128], index: 5, kind: input, shape index: {}]
  %s6 = inlined_call_operand.hbm [shape: f32[2,32], index: 6, kind: output, shape index: {}]
  %s7 = sld [smem:[#allocation0]]
  $region38: #{_lambda_.1} parent=0
    _
  %s9 = ssub.s32 1, %s7
  %s10 = scalar_select 0, %s9, %s7
  $region1: #{_lambda_.1} parent=0
    #allocation2 [shape = 'u8[16384]{0}', space=vmem, size = 0x4000, scoped, tag = 'input window, operand 4, single buffered']
    #allocation3 [shape = 's32[1]{0}', space=sflag, size = 0x4, scoped, tag = 'scoped memory for _lambda_.1']
    #allocation4 [shape = 's32[1]{0}', space=sflag, size = 0x4, scoped, tag = 'scoped memory for _lambda_.1']
    #allocation5 [shape = 'u8[1024]{0}', space=vmem, size = 0x400, scoped, tag = 'output window, operand 0, single buffered']
    %11 = vsyncpa [#allocation3], 0
    %12 = vsyncpa [#allocation4], 0
    // Predicated region
    $region2: #{_lambda_.1} parent=1 // pred_check
      _
    $region3: #{_lambda_.1} parent=1 // pred_check_branch
      %14 = sbr.rel (0) target = $region5
    $region4: #{_lambda_.1} parent=1 // pred_region
      _
    $region5: #{_lambda_.1} parent=1 // pred_fallthru
      _
    // Predicated region
    $region6: #{_lambda_.1} parent=1 // pred_check
      _
    $region7: #{_lambda_.1} parent=1 // pred_check_branch
      %16 = sbr.rel (0) target = $region9
    $region8: #{_lambda_.1} parent=1 // pred_region
      _
    $region9: #{_lambda_.1} parent=1 // pred_fallthru
      _
    // Predicated region
    $region10: #{_lambda_.1} parent=1 // pred_check
      _
    $region11: #{_lambda_.1} parent=1 // pred_check_branch
      %18 = sbr.rel (0) target = $region13
    $region12: #{_lambda_.1} parent=1 // pred_region
      _
    $region13: #{_lambda_.1} parent=1 // pred_fallthru
      _
    // Predicated region
    $region14: #{_lambda_.1} parent=1 // pred_check
      _
    $region15: #{_lambda_.1} parent=1 // pred_check_branch
      %20 = sbr.rel (0) target = $region17
    $region16: #{_lambda_.1} parent=1 // pred_region
      _
    $region17: #{_lambda_.1} parent=1 // pred_fallthru
      _
    // Predicated region
    $region18: #{_lambda_.1} parent=1 // pred_check
      _
    $region19: #{_lambda_.1} parent=1 // pred_check_branch
      %22 = sbr.rel (0) target = $region21
    $region20: #{_lambda_.1} parent=1 // pred_region
      %s24 = ssub.s32 512, 512
      %25 = vsyncadd [#allocation3], %s24
      %s26 = sshll.u32 [#allocation2], 4
      %s27 = int_to_ptr.vmem [resolvable:$true] %s26
      %32 = dma.hbm_to_vmem [thread:$0]  %s4, 512, %s27, [#allocation3], 128, 128, 8
    $region21: #{_lambda_.1} parent=1 // pred_fallthru
      _
    // Predicated region
    $region22: #{_lambda_.1} parent=1 // pred_check
      _
    $region23: #{_lambda_.1} parent=1 // pred_check_branch
      %34 = sbr.rel (0) target = $region25
    $region24: #{_lambda_.1} parent=1 // pred_region
      _
    $region25: #{_lambda_.1} parent=1 // pred_fallthru
      _
    // Predicated region
    $region26: #{_lambda_.1} parent=1 // pred_check
      _
    $region27: #{_lambda_.1} parent=1 // pred_check_branch
      %36 = sbr.rel (0) target = $region29
    $region28: #{_lambda_.1} parent=1 // pred_region
      %37 = dma.done [#allocation3], 512
    $region29: #{_lambda_.1} parent=1 // pred_fallthru
      _
    %v38 = vld [vmem:[%s1] sm:$0xff]
    %v39 = vld [vmem:[%s1 + $0x8] sm:$0xff]
    %v40 = vld [vmem:[%s2] sm:$0x1]
    %v41 = vld [vmem:[%s3] sm:$0xff]
    %v42 = vld [vmem:[%s3 + $0x8] sm:$0xff]
    %v43 = vld [vmem:[%s3 + $0x10] sm:$0xff]
    %v44 = vld [vmem:[%s3 + $0x18] sm:$0xff]
    %v45 = vld [vmem:[%s3 + $0x20] sm:$0xff]
    %v46 = vld [vmem:[%s3 + $0x28] sm:$0xff]
    %v47 = vld [vmem:[%s3 + $0x30] sm:$0xff]
    %v48 = vld [vmem:[%s3 + $0x38] sm:$0xff]
    %v49 = vld [vmem:[#allocation2] sm:$0xff]
    %v50 = vld [vmem:[#allocation2 + $0x8] sm:$0xff]
    %v51 = vld [vmem:[#allocation2 + $0x10] sm:$0xff]
    %v52 = vld [vmem:[#allocation2 + $0x18] sm:$0xff]
    %v53 = vld [vmem:[%s5] sm:$0x1]
    %v54 = vld [vmem:[%s0] sm:$0xff]
    %v55 = vld [vmem:[%s0 + $0x8] sm:$0xff]
    %v56 = vld [vmem:[%s0 + $0x10] sm:$0xff]
    %v57 = vld [vmem:[%s0 + $0x18] sm:$0xff]
    %v58 = vld [vmem:[%s0 + $0x20] sm:$0xff]
    %v59 = vld [vmem:[%s0 + $0x28] sm:$0xff]
    %v60 = vld [vmem:[%s0 + $0x30] sm:$0xff]
    %v61 = vld [vmem:[%s0 + $0x38] sm:$0xff]
    %v63 = vlaneseq
    %v64 = vshrl.u32 %v63, 7
    %v65 = vsub.s32 0, %v64
    %v66 = vrot.slane %v40, %v65
    %vm68 = vcmask 130048
    %v70 = vsel %vm68, %v54, 0
    %v73 = vsel %vm68, %v55, 0
    %v76 = vsel %vm68, %v56, 0
    %v79 = vsel %vm68, %v57, 0
    %v82 = vsel %vm68, %v58, 0
    %v85 = vsel %vm68, %v59, 0
    %v88 = vsel %vm68, %v60, 0
    %v91 = vsel %vm68, %v61, 0
    %93 = vmatprep.subr.mxu0 0.0
    %94 = vmatpush1.msra.mxu0 %v38
    %95 = vmatprep.subr.mxu0 0.0
    %96 = vmatpush1.msra.mxu0 %v39
    %97 = vmatprep.subr.mxu0 0.0
    %98 = vmatpush1.msra.mxu0 0.0
    %99 = vmatprep.subr.mxu0 0.0
    %100 = vmatpush1.msra.mxu0 0.0
    %101 = vmatprep.subr.mxu0 0.0
    %102 = vmatpush1.msra.mxu0 0.0
    %103 = vmatprep.subr.mxu0 0.0
    %104 = vmatpush1.msra.mxu0 0.0
    %105 = vmatprep.subr.mxu0 0.0
    %106 = vmatpush1.msra.mxu0 0.0
    %107 = vmatprep.subr.mxu0 0.0
    %108 = vmatpush1.msra.mxu0 0.0
    %109 = vmatprep.subr.mxu0 0.0
    %110 = vmatpush1.msra.mxu0 0.0
    %111 = vmatprep.subr.mxu0 0.0
    %112 = vmatpush1.msra.mxu0 0.0
    %113 = vmatprep.subr.mxu0 0.0
    %114 = vmatpush1.msra.mxu0 0.0
    %115 = vmatprep.subr.mxu0 0.0
    %116 = vmatpush1.msra.mxu0 0.0
    %117 = vmatprep.subr.mxu0 0.0
    %118 = vmatpush1.msra.mxu0 0.0
    %119 = vmatprep.subr.mxu0 0.0
    %120 = vmatpush1.msra.mxu0 0.0
    %121 = vmatprep.subr.mxu0 0.0
    %122 = vmatpush1.msra.mxu0 0.0
    %123 = vmatprep.subr.mxu0 0.0
    %124 = vmatpush1.msra.mxu0 0.0
    %125 = vmatprep.subr.mxu0 0.0
    %126 = vmatpush1.msra.mxu0 0.0
    %127 = vmatprep.subr.mxu0 0.0
    %128 = vmatpush1.msra.mxu0 0.0
    %129 = vmatprep.subr.mxu0 0.0
    %130 = vmatpush1.msra.mxu0 0.0
    %131 = vmatprep.subr.mxu0 0.0
    %132 = vmatpush1.msra.mxu0 0.0
    %133 = vmatprep.subr.mxu0 0.0
    %134 = vmatpush1.msra.mxu0 0.0
    %135 = vmatprep.subr.mxu0 0.0
    %136 = vmatpush1.msra.mxu0 0.0
    %137 = vmatprep.subr.mxu0 0.0
    %138 = vmatpush1.msra.mxu0 0.0
    %139 = vmatprep.subr.mxu0 0.0
    %140 = vmatpush1.msra.mxu0 0.0
    %141 = vmatprep.subr.mxu0 0.0
    %142 = vmatpush1.msra.mxu0 0.0
    %143 = vmatprep.subr.mxu0 0.0
    %144 = vmatpush1.msra.mxu0 0.0
    %145 = vmatprep.subr.mxu0 0.0
    %146 = vmatpush1.msra.mxu0 0.0
    %147 = vmatprep.subr.mxu0 0.0
    %148 = vmatpush1.msra.mxu0 0.0
    %149 = vmatprep.subr.mxu0 0.0
    %150 = vmatpush1.msra.mxu0 0.0
    %151 = vmatprep.subr.mxu0 0.0
    %152 = vmatpush1.msra.mxu0 0.0
    %153 = vmatprep.subr.mxu0 0.0
    %154 = vmatpush1.msra.mxu0 0.0
    %155 = vmatprep.subr.mxu0 0.0
    %156 = vmatpush1.msra.mxu0 0.0
    %157 = vmatprep.mubr.f32.mxu0 0.0
    %158 = vmatmul.mubr.f32.gmra.mrb[0].mxu0 %v70
    %v159 = vpop.f32.mrb[0].mxu0
    %v160 = vadd.f32 %v66, %v159
    %v161 = vpop.f32.mrb[0].mxu0
    %162 = vmatprep.mubr.f32.mxu0 0.0
    %163 = vmatmul.mubr.f32.gmra.mrb[0].mxu0 %v73
    %v164 = vpop.f32.mrb[0].mxu0
    %v165 = vadd.f32 %v66, %v164
    %v166 = vpop.f32.mrb[0].mxu0
    %167 = vmatprep.mubr.f32.mxu0 0.0
    %168 = vmatmul.mubr.f32.gmra.mrb[0].mxu0 %v76
    %v169 = vpop.f32.mrb[0].mxu0
    %v170 = vadd.f32 %v66, %v169
    %v171 = vpop.f32.mrb[0].mxu0
    %172 = vmatprep.mubr.f32.mxu0 0.0
    %173 = vmatmul.mubr.f32.gmra.mrb[0].mxu0 %v79
    %v174 = vpop.f32.mrb[0].mxu0
    %v175 = vadd.f32 %v66, %v174
    %v176 = vpop.f32.mrb[0].mxu0
    %177 = vmatprep.mubr.f32.mxu0 0.0
    %178 = vmatmul.mubr.f32.gmra.mrb[0].mxu0 %v82
    %v179 = vpop.f32.mrb[0].mxu0
    %v180 = vadd.f32 %v66, %v179
    %v181 = vpop.f32.mrb[0].mxu0
    %182 = vmatprep.mubr.f32.mxu0 0.0
    %183 = vmatmul.mubr.f32.gmra.mrb[0].mxu0 %v85
    %v184 = vpop.f32.mrb[0].mxu0
    %v185 = vadd.f32 %v66, %v184
    %v186 = vpop.f32.mrb[0].mxu0
    %187 = vmatprep.mubr.f32.mxu0 0.0
    %188 = vmatmul.mubr.f32.gmra.mrb[0].mxu0 %v88
    %v189 = vpop.f32.mrb[0].mxu0
    %v190 = vadd.f32 %v66, %v189
    %v191 = vpop.f32.mrb[0].mxu0
    %192 = vmatprep.mubr.f32.mxu0 0.0
    %193 = vmatmul.mubr.f32.gmra.mrb[0].mxu0 %v91
    %v194 = vpop.f32.mrb[0].mxu0
    %v195 = vadd.f32 %v66, %v194
    %v196 = vpop.f32.mrb[0].mxu0
    %197 = vdwg.mxu0
    %v198 = vlaneseq
    %v199 = vand.u32 %v198, 127
    %vm200 = vcmp.ge.s32.totalorder %v199, 64
    %vm201 = vcmp.lt.s32.totalorder %v199, 96
    %vm202 = vmand %vm200, %vm201
    %v203 = vxor.u32 %v160, 2147483648
    %v204 = vmul.f32 %v203, 1.442695
    %v205 = vpow.pop %v204
    %v206 = vadd.f32 %v205, 1.0
    %v207 = vrcp.pop %v206
    %v208 = vmul.f32 1.0, %v207
    %v209 = vtanh.pop %v160
    %v210 = vsel %vm202, %v209, %v208
    %v211 = vmul.f32 %v210, 0.0
    %213 = vrot.lane.b32.xlu0 %v210, 64
    %v214 = vpop.permute.xlu0 %213
    %v216 = vmul.f32 %v210, %v214
    %218 = vrot.lane.b32.xlu0 %v216, 32
    %v219 = vpop.permute.xlu0 %218
    %v221 = vadd.f32 %v211, %v219
    %v222 = vtanh.pop %v221
    %224 = vrot.lane.b32.xlu0 %v222, 64
    %v225 = vpop.permute.xlu0 %224
    %v227 = vmul.f32 %v210, %v225
    %229 = vrot.lane.b32.xlu0 %v227, 32
    %v230 = vpop.permute.xlu0 %229
    %vm231 = vcmask 261120
    %v232 = vsel %vm231, %v230, 0
    %234 = vmatprep.subr.mxu0 %v42
    %235 = vmatpush1.msra.mxu0 %v41
    %236 = vmatprep.subr.mxu0 %v44
    %237 = vmatpush1.msra.mxu0 %v43
    %238 = vmatprep.subr.mxu0 %v46
    %239 = vmatpush1.msra.mxu0 %v45
    %240 = vmatprep.subr.mxu0 %v48
    %241 = vmatpush1.msra.mxu0 %v47
    %242 = vmatprep.subr.mxu0 0.0
    %243 = vmatpush1.msra.mxu0 0.0
    %244 = vmatprep.subr.mxu0 0.0
    %245 = vmatpush1.msra.mxu0 0.0
    %246 = vmatprep.subr.mxu0 0.0
    %247 = vmatpush1.msra.mxu0 0.0
    %248 = vmatprep.subr.mxu0 0.0
    %249 = vmatpush1.msra.mxu0 0.0
    %250 = vmatprep.subr.mxu0 0.0
    %251 = vmatpush1.msra.mxu0 0.0
    %252 = vmatprep.subr.mxu0 0.0
    %253 = vmatpush1.msra.mxu0 0.0
    %254 = vmatprep.subr.mxu0 0.0
    %255 = vmatpush1.msra.mxu0 0.0
    %256 = vmatprep.subr.mxu0 0.0
    %257 = vmatpush1.msra.mxu0 0.0
    %258 = vmatprep.subr.mxu0 0.0
    %259 = vmatpush1.msra.mxu0 0.0
    %260 = vmatprep.subr.mxu0 0.0
    %261 = vmatpush1.msra.mxu0 0.0
    %262 = vmatprep.subr.mxu0 0.0
    %263 = vmatpush1.msra.mxu0 0.0
    %264 = vmatprep.subr.mxu0 0.0
    %265 = vmatpush1.msra.mxu0 0.0
    %266 = vmatprep.subr.mxu0 0.0
    %267 = vmatpush1.msra.mxu0 0.0
    %268 = vmatprep.subr.mxu0 0.0
    %269 = vmatpush1.msra.mxu0 0.0
    %270 = vmatprep.subr.mxu0 0.0
    %271 = vmatpush1.msra.mxu0 0.0
    %272 = vmatprep.subr.mxu0 0.0
    %273 = vmatpush1.msra.mxu0 0.0
    %274 = vmatprep.subr.mxu0 0.0
    %275 = vmatpush1.msra.mxu0 0.0
    %276 = vmatprep.subr.mxu0 0.0
    %277 = vmatpush1.msra.mxu0 0.0
    %278 = vmatprep.subr.mxu0 0.0
    %279 = vmatpush1.msra.mxu0 0.0
    %280 = vmatprep.subr.mxu0 0.0
    %281 = vmatpush1.msra.mxu0 0.0
    %282 = vmatprep.subr.mxu0 0.0
    %283 = vmatpush1.msra.mxu0 0.0
    %284 = vmatprep.subr.mxu0 0.0
    %285 = vmatpush1.msra.mxu0 0.0
    %286 = vmatprep.subr.mxu0 0.0
    %287 = vmatpush1.msra.mxu0 0.0
    %288 = vmatprep.subr.mxu0 0.0
    %289 = vmatpush1.msra.mxu0 0.0
    %290 = vmatprep.subr.mxu0 0.0
    %291 = vmatpush1.msra.mxu0 0.0
    %292 = vmatprep.subr.mxu0 0.0
    %293 = vmatpush1.msra.mxu0 0.0
    %294 = vmatprep.subr.mxu0 0.0
    %295 = vmatpush1.msra.mxu0 0.0
    %296 = vmatprep.subr.mxu0 0.0
    %297 = vmatpush1.msra.mxu0 0.0
    %298 = vmatprep.mubr.f32.mxu0 0.0
    %299 = vmatmul.mubr.f32.gmra.mrb[0].mxu0 %v232
    %v300 = vpop.f32.mrb[0].mxu0
    %v301 = vadd.f32 0.0, %v300
    %v302 = vpop.f32.mrb[0].mxu0
    %v303 = vadd.f32 0.0, %v302
    %304 = vdwg.mxu0
    %v305 = vadd.f32 %v165, %v301
    %v306 = vxor.u32 %v305, 2147483648
    %v307 = vmul.f32 %v306, 1.442695
    %v308 = vpow.pop %v307
    %v309 = vadd.f32 %v308, 1.0
    %v310 = vrcp.pop %v309
    %v311 = vmul.f32 1.0, %v310
    %v312 = vtanh.pop %v305
    %v313 = vsel %vm202, %v312, %v311
    %v314 = vmul.f32 %v313, %v221
    %316 = vrot.lane.b32.xlu0 %v313, 64
    %v317 = vpop.permute.xlu0 %316
    %v319 = vmul.f32 %v313, %v317
    %321 = vrot.lane.b32.xlu0 %v319, 32
    %v322 = vpop.permute.xlu0 %321
    %v324 = vadd.f32 %v314, %v322
    %v325 = vtanh.pop %v324
    %327 = vrot.lane.b32.xlu0 %v325, 64
    %v328 = vpop.permute.xlu0 %327
    %v330 = vmul.f32 %v313, %v328
    %v332 = vlaneseq
    %v333 = vshrl.u32 %v332, 7
    %v334 = vsub.s32 0, %v333
    %v335 = vrot.slane %v53, %v334
    %v337 = vadd.f32 %v303, %v335
    %v338 = vxor.u32 %v337, 2147483648
    %v339 = vmul.f32 %v338, 1.442695
    %v340 = vpow.pop %v339
    %v341 = vadd.f32 %v340, 1.0
    %v342 = vrcp.pop %v341
    %v343 = vmul.f32 1.0, %v342
    %v344 = vtanh.pop %v337
    %v345 = vsel %vm202, %v344, %v343
    %v346 = vmul.f32 %v345, 0.0
    %348 = vrot.lane.b32.xlu0 %v345, 64
    %v349 = vpop.permute.xlu0 %348
    %v351 = vmul.f32 %v345, %v349
    %353 = vrot.lane.b32.xlu0 %v351, 32
    %v354 = vpop.permute.xlu0 %353
    %v356 = vadd.f32 %v346, %v354
    %v357 = vtanh.pop %v356
    %359 = vrot.lane.b32.xlu0 %v357, 64
    %v360 = vpop.permute.xlu0 %359
    %v362 = vmul.f32 %v345, %v360
    %364 = vrot.lane.b32.xlu0 %v330, 32
    %v365 = vpop.permute.xlu0 %364
    %v366 = vsel %vm231, %v365, 0
    %368 = vmatprep.subr.mxu0 %v42
    %369 = vmatpush1.msra.mxu0 %v41
    %370 = vmatprep.subr.mxu0 %v44
    %371 = vmatpush1.msra.mxu0 %v43
    %372 = vmatprep.subr.mxu0 %v46
    %373 = vmatpush1.msra.mxu0 %v45
    %374 = vmatprep.subr.mxu0 %v48
    %375 = vmatpush1.msra.mxu0 %v47
    %376 = vmatprep.subr.mxu0 0.0
    %377 = vmatpush1.msra.mxu0 0.0
    %378 = vmatprep.subr.mxu0 0.0
    %379 = vmatpush1.msra.mxu0 0.0
    %380 = vmatprep.subr.mxu0 0.0
    %381 = vmatpush1.msra.mxu0 0.0
    %382 = vmatprep.subr.mxu0 0.0
    %383 = vmatpush1.msra.mxu0 0.0
    %384 = vmatprep.subr.mxu0 0.0
    %385 = vmatpush1.msra.mxu0 0.0
    %386 = vmatprep.subr.mxu0 0.0
    %387 = vmatpush1.msra.mxu0 0.0
    %388 = vmatprep.subr.mxu0 0.0
    %389 = vmatpush1.msra.mxu0 0.0
    %390 = vmatprep.subr.mxu0 0.0
    %391 = vmatpush1.msra.mxu0 0.0
    %392 = vmatprep.subr.mxu0 0.0
    %393 = vmatpush1.msra.mxu0 0.0
    %394 = vmatprep.subr.mxu0 0.0
    %395 = vmatpush1.msra.mxu0 0.0
    %396 = vmatprep.subr.mxu0 0.0
    %397 = vmatpush1.msra.mxu0 0.0
    %398 = vmatprep.subr.mxu0 0.0
    %399 = vmatpush1.msra.mxu0 0.0
    %400 = vmatprep.subr.mxu0 0.0
    %401 = vmatpush1.msra.mxu0 0.0
    %402 = vmatprep.subr.mxu0 0.0
    %403 = vmatpush1.msra.mxu0 0.0
    %404 = vmatprep.subr.mxu0 0.0
    %405 = vmatpush1.msra.mxu0 0.0
    %406 = vmatprep.subr.mxu0 0.0
    %407 = vmatpush1.msra.mxu0 0.0
    %408 = vmatprep.subr.mxu0 0.0
    %409 = vmatpush1.msra.mxu0 0.0
    %410 = vmatprep.subr.mxu0 0.0
    %411 = vmatpush1.msra.mxu0 0.0
    %412 = vmatprep.subr.mxu0 0.0
    %413 = vmatpush1.msra.mxu0 0.0
    %414 = vmatprep.subr.mxu0 0.0
    %415 = vmatpush1.msra.mxu0 0.0
    %416 = vmatprep.subr.mxu0 0.0
    %417 = vmatpush1.msra.mxu0 0.0
    %418 = vmatprep.subr.mxu0 0.0
    %419 = vmatpush1.msra.mxu0 0.0
    %420 = vmatprep.subr.mxu0 0.0
    %421 = vmatpush1.msra.mxu0 0.0
    %422 = vmatprep.subr.mxu0 0.0
    %423 = vmatpush1.msra.mxu0 0.0
    %424 = vmatprep.subr.mxu0 0.0
    %425 = vmatpush1.msra.mxu0 0.0
    %426 = vmatprep.subr.mxu0 0.0
    %427 = vmatpush1.msra.mxu0 0.0
    %428 = vmatprep.subr.mxu0 0.0
    %429 = vmatpush1.msra.mxu0 0.0
    %430 = vmatprep.subr.mxu0 0.0
    %431 = vmatpush1.msra.mxu0 0.0
    %432 = vmatprep.mubr.f32.mxu0 0.0
    %433 = vmatmul.mubr.f32.gmra.mrb[0].mxu0 %v366
    %v434 = vpop.f32.mrb[0].mxu0
    %v435 = vadd.f32 0.0, %v434
    %v436 = vpop.f32.mrb[0].mxu0
    %v437 = vadd.f32 0.0, %v436
    %438 = vdwg.mxu0
    %440 = vrot.lane.b32.xlu0 %v362, 32
    %v441 = vpop.permute.xlu0 %440
    %v442 = vsel %vm231, %v441, 0
    %444 = vmatprep.subr.mxu0 0.0
    %445 = vmatpush1.msra.mxu0 %v49
    %446 = vmatprep.subr.mxu0 0.0
    %447 = vmatpush1.msra.mxu0 %v50
    %448 = vmatprep.subr.mxu0 0.0
    %449 = vmatpush1.msra.mxu0 %v51
    %450 = vmatprep.subr.mxu0 0.0
    %451 = vmatpush1.msra.mxu0 %v52
    %452 = vmatprep.subr.mxu0 0.0
    %453 = vmatpush1.msra.mxu0 0.0
    %454 = vmatprep.subr.mxu0 0.0
    %455 = vmatpush1.msra.mxu0 0.0
    %456 = vmatprep.subr.mxu0 0.0
    %457 = vmatpush1.msra.mxu0 0.0
    %458 = vmatprep.subr.mxu0 0.0
    %459 = vmatpush1.msra.mxu0 0.0
    %460 = vmatprep.subr.mxu0 0.0
    %461 = vmatpush1.msra.mxu0 0.0
    %462 = vmatprep.subr.mxu0 0.0
    %463 = vmatpush1.msra.mxu0 0.0
    %464 = vmatprep.subr.mxu0 0.0
    %465 = vmatpush1.msra.mxu0 0.0
    %466 = vmatprep.subr.mxu0 0.0
    %467 = vmatpush1.msra.mxu0 0.0
    %468 = vmatprep.subr.mxu0 0.0
    %469 = vmatpush1.msra.mxu0 0.0
    %470 = vmatprep.subr.mxu0 0.0
    %471 = vmatpush1.msra.mxu0 0.0
    %472 = vmatprep.subr.mxu0 0.0
    %473 = vmatpush1.msra.mxu0 0.0
    %474 = vmatprep.subr.mxu0 0.0
    %475 = vmatpush1.msra.mxu0 0.0
    %476 = vmatprep.subr.mxu0 0.0
    %477 = vmatpush1.msra.mxu0 0.0
    %478 = vmatprep.subr.mxu0 0.0
    %479 = vmatpush1.msra.mxu0 0.0
    %480 = vmatprep.subr.mxu0 0.0
    %481 = vmatpush1.msra.mxu0 0.0
    %482 = vmatprep.subr.mxu0 0.0
    %483 = vmatpush1.msra.mxu0 0.0
    %484 = vmatprep.subr.mxu0 0.0
    %485 = vmatpush1.msra.mxu0 0.0
    %486 = vmatprep.subr.mxu0 0.0
    %487 = vmatpush1.msra.mxu0 0.0
    %488 = vmatprep.subr.mxu0 0.0
    %489 = vmatpush1.msra.mxu0 0.0
    %490 = vmatprep.subr.mxu0 0.0
    %491 = vmatpush1.msra.mxu0 0.0
    %492 = vmatprep.subr.mxu0 0.0
    %493 = vmatpush1.msra.mxu0 0.0
    %494 = vmatprep.subr.mxu0 0.0
    %495 = vmatpush1.msra.mxu0 0.0
    %496 = vmatprep.subr.mxu0 0.0
    %497 = vmatpush1.msra.mxu0 0.0
    %498 = vmatprep.subr.mxu0 0.0
    %499 = vmatpush1.msra.mxu0 0.0
    %500 = vmatprep.subr.mxu0 0.0
    %501 = vmatpush1.msra.mxu0 0.0
    %502 = vmatprep.subr.mxu0 0.0
    %503 = vmatpush1.msra.mxu0 0.0
    %504 = vmatprep.subr.mxu0 0.0
    %505 = vmatpush1.msra.mxu0 0.0
    %506 = vmatprep.subr.mxu0 0.0
    %507 = vmatpush1.msra.mxu0 0.0
    %508 = vmatprep.mubr.f32.mxu0 0.0
    %509 = vmatmul.mubr.f32.gmra.mrb[0].mxu0 %v442
    %v510 = vpop.f32.mrb[0].mxu0
    %v511 = vadd.f32 0.0, %v510
    %v512 = vpop.f32.mrb[0].mxu0
    %513 = vdwg.mxu0
    %v514 = vadd.f32 %v170, %v435
    %v515 = vxor.u32 %v514, 2147483648
    %v516 = vmul.f32 %v515, 1.442695
    %v517 = vpow.pop %v516
    %v518 = vadd.f32 %v517, 1.0
    %v519 = vrcp.pop %v518
    %v520 = vmul.f32 1.0, %v519
    %v521 = vtanh.pop %v514
    %v522 = vsel %vm202, %v521, %v520
    %v523 = vmul.f32 %v522, %v324
    %525 = vrot.lane.b32.xlu0 %v522, 64
    %v526 = vpop.permute.xlu0 %525
    %v528 = vmul.f32 %v522, %v526
    %530 = vrot.lane.b32.xlu0 %v528, 32
    %v531 = vpop.permute.xlu0 %530
    %v533 = vadd.f32 %v523, %v531
    %v534 = vtanh.pop %v533
    %536 = vrot.lane.b32.xlu0 %v534, 64
    %v537 = vpop.permute.xlu0 %536
    %v539 = vmul.f32 %v522, %v537
    %v540 = vadd.f32 %v437, %v335
    %v541 = vadd.f32 %v540, %v511
    %v542 = vxor.u32 %v541, 2147483648
    %v543 = vmul.f32 %v542, 1.442695
    %v544 = vpow.pop %v543
    %v545 = vadd.f32 %v544, 1.0
    %v546 = vrcp.pop %v545
    %v547 = vmul.f32 1.0, %v546
    %v548 = vtanh.pop %v541
    %v549 = vsel %vm202, %v548, %v547
    %v550 = vmul.f32 %v549, %v356
    %552 = vrot.lane.b32.xlu0 %v549, 64
    %v553 = vpop.permute.xlu0 %552
    %v555 = vmul.f32 %v549, %v553
    %557 = vrot.lane.b32.xlu0 %v555, 32
    %v558 = vpop.permute.xlu0 %557
    %v560 = vadd.f32 %v550, %v558
    %v561 = vtanh.pop %v560
    %563 = vrot.lane.b32.xlu0 %v561, 64
    %v564 = vpop.permute.xlu0 %563
    %v566 = vmul.f32 %v549, %v564
    %568 = vrot.lane.b32.xlu0 %v539, 32
    %v569 = vpop.permute.xlu0 %568
    %v570 = vsel %vm231, %v569, 0
    %572 = vmatprep.subr.mxu0 %v42
    %573 = vmatpush1.msra.mxu0 %v41
    %574 = vmatprep.subr.mxu0 %v44
    %575 = vmatpush1.msra.mxu0 %v43
    %576 = vmatprep.subr.mxu0 %v46
    %577 = vmatpush1.msra.mxu0 %v45
    %578 = vmatprep.subr.mxu0 %v48
    %579 = vmatpush1.msra.mxu0 %v47
    %580 = vmatprep.subr.mxu0 0.0
    %581 = vmatpush1.msra.mxu0 0.0
    %582 = vmatprep.subr.mxu0 0.0
    %583 = vmatpush1.msra.mxu0 0.0
    %584 = vmatprep.subr.mxu0 0.0
    %585 = vmatpush1.msra.mxu0 0.0
    %586 = vmatprep.subr.mxu0 0.0
    %587 = vmatpush1.msra.mxu0 0.0
    %588 = vmatprep.subr.mxu0 0.0
    %589 = vmatpush1.msra.mxu0 0.0
    %590 = vmatprep.subr.mxu0 0.0
    %591 = vmatpush1.msra.mxu0 0.0
    %592 = vmatprep.subr.mxu0 0.0
    %593 = vmatpush1.msra.mxu0 0.0
    %594 = vmatprep.subr.mxu0 0.0
    %595 = vmatpush1.msra.mxu0 0.0
    %596 = vmatprep.subr.mxu0 0.0
    %597 = vmatpush1.msra.mxu0 0.0
    %598 = vmatprep.subr.mxu0 0.0
    %599 = vmatpush1.msra.mxu0 0.0
    %600 = vmatprep.subr.mxu0 0.0
    %601 = vmatpush1.msra.mxu0 0.0
    %602 = vmatprep.subr.mxu0 0.0
    %603 = vmatpush1.msra.mxu0 0.0
    %604 = vmatprep.subr.mxu0 0.0
    %605 = vmatpush1.msra.mxu0 0.0
    %606 = vmatprep.subr.mxu0 0.0
    %607 = vmatpush1.msra.mxu0 0.0
    %608 = vmatprep.subr.mxu0 0.0
    %609 = vmatpush1.msra.mxu0 0.0
    %610 = vmatprep.subr.mxu0 0.0
    %611 = vmatpush1.msra.mxu0 0.0
    %612 = vmatprep.subr.mxu0 0.0
    %613 = vmatpush1.msra.mxu0 0.0
    %614 = vmatprep.subr.mxu0 0.0
    %615 = vmatpush1.msra.mxu0 0.0
    %616 = vmatprep.subr.mxu0 0.0
    %617 = vmatpush1.msra.mxu0 0.0
    %618 = vmatprep.subr.mxu0 0.0
    %619 = vmatpush1.msra.mxu0 0.0
    %620 = vmatprep.subr.mxu0 0.0
    %621 = vmatpush1.msra.mxu0 0.0
    %622 = vmatprep.subr.mxu0 0.0
    %623 = vmatpush1.msra.mxu0 0.0
    %624 = vmatprep.subr.mxu0 0.0
    %625 = vmatpush1.msra.mxu0 0.0
    %626 = vmatprep.subr.mxu0 0.0
    %627 = vmatpush1.msra.mxu0 0.0
    %628 = vmatprep.subr.mxu0 0.0
    %629 = vmatpush1.msra.mxu0 0.0
    %630 = vmatprep.subr.mxu0 0.0
    %631 = vmatpush1.msra.mxu0 0.0
    %632 = vmatprep.subr.mxu0 0.0
    %633 = vmatpush1.msra.mxu0 0.0
    %634 = vmatprep.subr.mxu0 0.0
    %635 = vmatpush1.msra.mxu0 0.0
    %636 = vmatprep.mubr.f32.mxu0 0.0
    %637 = vmatmul.mubr.f32.gmra.mrb[0].mxu0 %v570
    %v638 = vpop.f32.mrb[0].mxu0
    %v639 = vadd.f32 0.0, %v638
    %v640 = vpop.f32.mrb[0].mxu0
    %v641 = vadd.f32 0.0, %v640
    %642 = vdwg.mxu0
    %644 = vrot.lane.b32.xlu0 %v566, 32
    %v645 = vpop.permute.xlu0 %644
    %v646 = vsel %vm231, %v645, 0
    %648 = vmatprep.subr.mxu0 0.0
    %649 = vmatpush1.msra.mxu0 %v49
    %650 = vmatprep.subr.mxu0 0.0
    %651 = vmatpush1.msra.mxu0 %v50
    %652 = vmatprep.subr.mxu0 0.0
    %653 = vmatpush1.msra.mxu0 %v51
    %654 = vmatprep.subr.mxu0 0.0
    %655 = vmatpush1.msra.mxu0 %v52
    %656 = vmatprep.subr.mxu0 0.0
    %657 = vmatpush1.msra.mxu0 0.0
    %658 = vmatprep.subr.mxu0 0.0
    %659 = vmatpush1.msra.mxu0 0.0
    %660 = vmatprep.subr.mxu0 0.0
    %661 = vmatpush1.msra.mxu0 0.0
    %662 = vmatprep.subr.mxu0 0.0
    %663 = vmatpush1.msra.mxu0 0.0
    %664 = vmatprep.subr.mxu0 0.0
    %665 = vmatpush1.msra.mxu0 0.0
    %666 = vmatprep.subr.mxu0 0.0
    %667 = vmatpush1.msra.mxu0 0.0
    %668 = vmatprep.subr.mxu0 0.0
    %669 = vmatpush1.msra.mxu0 0.0
    %670 = vmatprep.subr.mxu0 0.0
    %671 = vmatpush1.msra.mxu0 0.0
    %672 = vmatprep.subr.mxu0 0.0
    %673 = vmatpush1.msra.mxu0 0.0
    %674 = vmatprep.subr.mxu0 0.0
    %675 = vmatpush1.msra.mxu0 0.0
    %676 = vmatprep.subr.mxu0 0.0
    %677 = vmatpush1.msra.mxu0 0.0
    %678 = vmatprep.subr.mxu0 0.0
    %679 = vmatpush1.msra.mxu0 0.0
    %680 = vmatprep.subr.mxu0 0.0
    %681 = vmatpush1.msra.mxu0 0.0
    %682 = vmatprep.subr.mxu0 0.0
    %683 = vmatpush1.msra.mxu0 0.0
    %684 = vmatprep.subr.mxu0 0.0
    %685 = vmatpush1.msra.mxu0 0.0
    %686 = vmatprep.subr.mxu0 0.0
    %687 = vmatpush1.msra.mxu0 0.0
    %688 = vmatprep.subr.mxu0 0.0
    %689 = vmatpush1.msra.mxu0 0.0
    %690 = vmatprep.subr.mxu0 0.0
    %691 = vmatpush1.msra.mxu0 0.0
    %692 = vmatprep.subr.mxu0 0.0
    %693 = vmatpush1.msra.mxu0 0.0
    %694 = vmatprep.subr.mxu0 0.0
    %695 = vmatpush1.msra.mxu0 0.0
    %696 = vmatprep.subr.mxu0 0.0
    %697 = vmatpush1.msra.mxu0 0.0
    %698 = vmatprep.subr.mxu0 0.0
    %699 = vmatpush1.msra.mxu0 0.0
    %700 = vmatprep.subr.mxu0 0.0
    %701 = vmatpush1.msra.mxu0 0.0
    %702 = vmatprep.subr.mxu0 0.0
    %703 = vmatpush1.msra.mxu0 0.0
    %704 = vmatprep.subr.mxu0 0.0
    %705 = vmatpush1.msra.mxu0 0.0
    %706 = vmatprep.subr.mxu0 0.0
    %707 = vmatpush1.msra.mxu0 0.0
    %708 = vmatprep.subr.mxu0 0.0
    %709 = vmatpush1.msra.mxu0 0.0
    %710 = vmatprep.subr.mxu0 0.0
    %711 = vmatpush1.msra.mxu0 0.0
    %712 = vmatprep.mubr.f32.mxu0 0.0
    %713 = vmatmul.mubr.f32.gmra.mrb[0].mxu0 %v646
    %v714 = vpop.f32.mrb[0].mxu0
    %v715 = vadd.f32 0.0, %v714
    %v716 = vpop.f32.mrb[0].mxu0
    %717 = vdwg.mxu0
    %v718 = vadd.f32 %v175, %v639
    %v719 = vxor.u32 %v718, 2147483648
    %v720 = vmul.f32 %v719, 1.442695
    %v721 = vpow.pop %v720
    %v722 = vadd.f32 %v721, 1.0
    %v723 = vrcp.pop %v722
    %v724 = vmul.f32 1.0, %v723
    %v725 = vtanh.pop %v718
    %v726 = vsel %vm202, %v725, %v724
    %v727 = vmul.f32 %v726, %v533
    %729 = vrot.lane.b32.xlu0 %v726, 64
    %v730 = vpop.permute.xlu0 %729
    %v732 = vmul.f32 %v726, %v730
    %734 = vrot.lane.b32.xlu0 %v732, 32
    %v735 = vpop.permute.xlu0 %734
    %v737 = vadd.f32 %v727, %v735
    %v738 = vtanh.pop %v737
    %740 = vrot.lane.b32.xlu0 %v738, 64
    %v741 = vpop.permute.xlu0 %740
    %v743 = vmul.f32 %v726, %v741
    %v744 = vadd.f32 %v641, %v335
    %v745 = vadd.f32 %v744, %v715
    %v746 = vxor.u32 %v745, 2147483648
    %v747 = vmul.f32 %v746, 1.442695
    %v748 = vpow.pop %v747
    %v749 = vadd.f32 %v748, 1.0
    %v750 = vrcp.pop %v749
    %v751 = vmul.f32 1.0, %v750
    %v752 = vtanh.pop %v745
    %v753 = vsel %vm202, %v752, %v751
    %v754 = vmul.f32 %v753, %v560
    %756 = vrot.lane.b32.xlu0 %v753, 64
    %v757 = vpop.permute.xlu0 %756
    %v759 = vmul.f32 %v753, %v757
    %761 = vrot.lane.b32.xlu0 %v759, 32
    %v762 = vpop.permute.xlu0 %761
    %v764 = vadd.f32 %v754, %v762
    %v765 = vtanh.pop %v764
    %767 = vrot.lane.b32.xlu0 %v765, 64
    %v768 = vpop.permute.xlu0 %767
    %v770 = vmul.f32 %v753, %v768
    %772 = vrot.lane.b32.xlu0 %v743, 32
    %v773 = vpop.permute.xlu0 %772
    %v774 = vsel %vm231, %v773, 0
    %776 = vmatprep.subr.mxu0 %v42
    %777 = vmatpush1.msra.mxu0 %v41
    %778 = vmatprep.subr.mxu0 %v44
    %779 = vmatpush1.msra.mxu0 %v43
    %780 = vmatprep.subr.mxu0 %v46
    %781 = vmatpush1.msra.mxu0 %v45
    %782 = vmatprep.subr.mxu0 %v48
    %783 = vmatpush1.msra.mxu0 %v47
    %784 = vmatprep.subr.mxu0 0.0
    %785 = vmatpush1.msra.mxu0 0.0
    %786 = vmatprep.subr.mxu0 0.0
    %787 = vmatpush1.msra.mxu0 0.0
    %788 = vmatprep.subr.mxu0 0.0
    %789 = vmatpush1.msra.mxu0 0.0
    %790 = vmatprep.subr.mxu0 0.0
    %791 = vmatpush1.msra.mxu0 0.0
    %792 = vmatprep.subr.mxu0 0.0
    %793 = vmatpush1.msra.mxu0 0.0
    %794 = vmatprep.subr.mxu0 0.0
    %795 = vmatpush1.msra.mxu0 0.0
    %796 = vmatprep.subr.mxu0 0.0
    %797 = vmatpush1.msra.mxu0 0.0
    %798 = vmatprep.subr.mxu0 0.0
    %799 = vmatpush1.msra.mxu0 0.0
    %800 = vmatprep.subr.mxu0 0.0
    %801 = vmatpush1.msra.mxu0 0.0
    %802 = vmatprep.subr.mxu0 0.0
    %803 = vmatpush1.msra.mxu0 0.0
    %804 = vmatprep.subr.mxu0 0.0
    %805 = vmatpush1.msra.mxu0 0.0
    %806 = vmatprep.subr.mxu0 0.0
    %807 = vmatpush1.msra.mxu0 0.0
    %808 = vmatprep.subr.mxu0 0.0
    %809 = vmatpush1.msra.mxu0 0.0
    %810 = vmatprep.subr.mxu0 0.0
    %811 = vmatpush1.msra.mxu0 0.0
    %812 = vmatprep.subr.mxu0 0.0
    %813 = vmatpush1.msra.mxu0 0.0
    %814 = vmatprep.subr.mxu0 0.0
    %815 = vmatpush1.msra.mxu0 0.0
    %816 = vmatprep.subr.mxu0 0.0
    %817 = vmatpush1.msra.mxu0 0.0
    %818 = vmatprep.subr.mxu0 0.0
    %819 = vmatpush1.msra.mxu0 0.0
    %820 = vmatprep.subr.mxu0 0.0
    %821 = vmatpush1.msra.mxu0 0.0
    %822 = vmatprep.subr.mxu0 0.0
    %823 = vmatpush1.msra.mxu0 0.0
    %824 = vmatprep.subr.mxu0 0.0
    %825 = vmatpush1.msra.mxu0 0.0
    %826 = vmatprep.subr.mxu0 0.0
    %827 = vmatpush1.msra.mxu0 0.0
    %828 = vmatprep.subr.mxu0 0.0
    %829 = vmatpush1.msra.mxu0 0.0
    %830 = vmatprep.subr.mxu0 0.0
    %831 = vmatpush1.msra.mxu0 0.0
    %832 = vmatprep.subr.mxu0 0.0
    %833 = vmatpush1.msra.mxu0 0.0
    %834 = vmatprep.subr.mxu0 0.0
    %835 = vmatpush1.msra.mxu0 0.0
    %836 = vmatprep.subr.mxu0 0.0
    %837 = vmatpush1.msra.mxu0 0.0
    %838 = vmatprep.subr.mxu0 0.0
    %839 = vmatpush1.msra.mxu0 0.0
    %840 = vmatprep.mubr.f32.mxu0 0.0
    %841 = vmatmul.mubr.f32.gmra.mrb[0].mxu0 %v774
    %v842 = vpop.f32.mrb[0].mxu0
    %v843 = vadd.f32 0.0, %v842
    %v844 = vpop.f32.mrb[0].mxu0
    %v845 = vadd.f32 0.0, %v844
    %846 = vdwg.mxu0
    %848 = vrot.lane.b32.xlu0 %v770, 32
    %v849 = vpop.permute.xlu0 %848
    %v850 = vsel %vm231, %v849, 0
    %852 = vmatprep.subr.mxu0 0.0
    %853 = vmatpush1.msra.mxu0 %v49
    %854 = vmatprep.subr.mxu0 0.0
    %855 = vmatpush1.msra.mxu0 %v50
    %856 = vmatprep.subr.mxu0 0.0
    %857 = vmatpush1.msra.mxu0 %v51
    %858 = vmatprep.subr.mxu0 0.0
    %859 = vmatpush1.msra.mxu0 %v52
    %860 = vmatprep.subr.mxu0 0.0
    %861 = vmatpush1.msra.mxu0 0.0
    %862 = vmatprep.subr.mxu0 0.0
    %863 = vmatpush1.msra.mxu0 0.0
    %864 = vmatprep.subr.mxu0 0.0
    %865 = vmatpush1.msra.mxu0 0.0
    %866 = vmatprep.subr.mxu0 0.0
    %867 = vmatpush1.msra.mxu0 0.0
    %868 = vmatprep.subr.mxu0 0.0
    %869 = vmatpush1.msra.mxu0 0.0
    %870 = vmatprep.subr.mxu0 0.0
    %871 = vmatpush1.msra.mxu0 0.0
    %872 = vmatprep.subr.mxu0 0.0
    %873 = vmatpush1.msra.mxu0 0.0
    %874 = vmatprep.subr.mxu0 0.0
    %875 = vmatpush1.msra.mxu0 0.0
    %876 = vmatprep.subr.mxu0 0.0
    %877 = vmatpush1.msra.mxu0 0.0
    %878 = vmatprep.subr.mxu0 0.0
    %879 = vmatpush1.msra.mxu0 0.0
    %880 = vmatprep.subr.mxu0 0.0
    %881 = vmatpush1.msra.mxu0 0.0
    %882 = vmatprep.subr.mxu0 0.0
    %883 = vmatpush1.msra.mxu0 0.0
    %884 = vmatprep.subr.mxu0 0.0
    %885 = vmatpush1.msra.mxu0 0.0
    %886 = vmatprep.subr.mxu0 0.0
    %887 = vmatpush1.msra.mxu0 0.0
    %888 = vmatprep.subr.mxu0 0.0
    %889 = vmatpush1.msra.mxu0 0.0
    %890 = vmatprep.subr.mxu0 0.0
    %891 = vmatpush1.msra.mxu0 0.0
    %892 = vmatprep.subr.mxu0 0.0
    %893 = vmatpush1.msra.mxu0 0.0
    %894 = vmatprep.subr.mxu0 0.0
    %895 = vmatpush1.msra.mxu0 0.0
    %896 = vmatprep.subr.mxu0 0.0
    %897 = vmatpush1.msra.mxu0 0.0
    %898 = vmatprep.subr.mxu0 0.0
    %899 = vmatpush1.msra.mxu0 0.0
    %900 = vmatprep.subr.mxu0 0.0
    %901 = vmatpush1.msra.mxu0 0.0
    %902 = vmatprep.subr.mxu0 0.0
    %903 = vmatpush1.msra.mxu0 0.0
    %904 = vmatprep.subr.mxu0 0.0
    %905 = vmatpush1.msra.mxu0 0.0
    %906 = vmatprep.subr.mxu0 0.0
    %907 = vmatpush1.msra.mxu0 0.0
    %908 = vmatprep.subr.mxu0 0.0
    %909 = vmatpush1.msra.mxu0 0.0
    %910 = vmatprep.subr.mxu0 0.0
    %911 = vmatpush1.msra.mxu0 0.0
    %912 = vmatprep.subr.mxu0 0.0
    %913 = vmatpush1.msra.mxu0 0.0
    %914 = vmatprep.subr.mxu0 0.0
    %915 = vmatpush1.msra.mxu0 0.0
    %916 = vmatprep.mubr.f32.mxu0 0.0
    %917 = vmatmul.mubr.f32.gmra.mrb[0].mxu0 %v850
    %v918 = vpop.f32.mrb[0].mxu0
    %v919 = vadd.f32 0.0, %v918
    %v920 = vpop.f32.mrb[0].mxu0
    %921 = vdwg.mxu0
    %v922 = vadd.f32 %v180, %v843
    %v923 = vxor.u32 %v922, 2147483648
    %v924 = vmul.f32 %v923, 1.442695
    %v925 = vpow.pop %v924
    %v926 = vadd.f32 %v925, 1.0
    %v927 = vrcp.pop %v926
    %v928 = vmul.f32 1.0, %v927
    %v929 = vtanh.pop %v922
    %v930 = vsel %vm202, %v929, %v928
    %v931 = vmul.f32 %v930, %v737
    %933 = vrot.lane.b32.xlu0 %v930, 64
    %v934 = vpop.permute.xlu0 %933
    %v936 = vmul.f32 %v930, %v934
    %938 = vrot.lane.b32.xlu0 %v936, 32
    %v939 = vpop.permute.xlu0 %938
    %v941 = vadd.f32 %v931, %v939
    %v942 = vtanh.pop %v941
    %944 = vrot.lane.b32.xlu0 %v942, 64
    %v945 = vpop.permute.xlu0 %944
    %v947 = vmul.f32 %v930, %v945
    %v948 = vadd.f32 %v845, %v335
    %v949 = vadd.f32 %v948, %v919
    %v950 = vxor.u32 %v949, 2147483648
    %v951 = vmul.f32 %v950, 1.442695
    %v952 = vpow.pop %v951
    %v953 = vadd.f32 %v952, 1.0
    %v954 = vrcp.pop %v953
    %v955 = vmul.f32 1.0, %v954
    %v956 = vtanh.pop %v949
    %v957 = vsel %vm202, %v956, %v955
    %v958 = vmul.f32 %v957, %v764
    %960 = vrot.lane.b32.xlu0 %v957, 64
    %v961 = vpop.permute.xlu0 %960
    %v963 = vmul.f32 %v957, %v961
    %965 = vrot.lane.b32.xlu0 %v963, 32
    %v966 = vpop.permute.xlu0 %965
    %v968 = vadd.f32 %v958, %v966
    %v969 = vtanh.pop %v968
    %971 = vrot.lane.b32.xlu0 %v969, 64
    %v972 = vpop.permute.xlu0 %971
    %v974 = vmul.f32 %v957, %v972
    %976 = vrot.lane.b32.xlu0 %v947, 32
    %v977 = vpop.permute.xlu0 %976
    %v978 = vsel %vm231, %v977, 0
    %980 = vmatprep.subr.mxu0 %v42
    %981 = vmatpush1.msra.mxu0 %v41
    %982 = vmatprep.subr.mxu0 %v44
    %983 = vmatpush1.msra.mxu0 %v43
    %984 = vmatprep.subr.mxu0 %v46
    %985 = vmatpush1.msra.mxu0 %v45
    %986 = vmatprep.subr.mxu0 %v48
    %987 = vmatpush1.msra.mxu0 %v47
    %988 = vmatprep.subr.mxu0 0.0
    %989 = vmatpush1.msra.mxu0 0.0
    %990 = vmatprep.subr.mxu0 0.0
    %991 = vmatpush1.msra.mxu0 0.0
    %992 = vmatprep.subr.mxu0 0.0
    %993 = vmatpush1.msra.mxu0 0.0
    %994 = vmatprep.subr.mxu0 0.0
    %995 = vmatpush1.msra.mxu0 0.0
    %996 = vmatprep.subr.mxu0 0.0
    %997 = vmatpush1.msra.mxu0 0.0
    %998 = vmatprep.subr.mxu0 0.0
    %999 = vmatpush1.msra.mxu0 0.0
    %1000 = vmatprep.subr.mxu0 0.0
    %1001 = vmatpush1.msra.mxu0 0.0
    %1002 = vmatprep.subr.mxu0 0.0
    %1003 = vmatpush1.msra.mxu0 0.0
    %1004 = vmatprep.subr.mxu0 0.0
    %1005 = vmatpush1.msra.mxu0 0.0
    %1006 = vmatprep.subr.mxu0 0.0
    %1007 = vmatpush1.msra.mxu0 0.0
    %1008 = vmatprep.subr.mxu0 0.0
    %1009 = vmatpush1.msra.mxu0 0.0
    %1010 = vmatprep.subr.mxu0 0.0
    %1011 = vmatpush1.msra.mxu0 0.0
    %1012 = vmatprep.subr.mxu0 0.0
    %1013 = vmatpush1.msra.mxu0 0.0
    %1014 = vmatprep.subr.mxu0 0.0
    %1015 = vmatpush1.msra.mxu0 0.0
    %1016 = vmatprep.subr.mxu0 0.0
    %1017 = vmatpush1.msra.mxu0 0.0
    %1018 = vmatprep.subr.mxu0 0.0
    %1019 = vmatpush1.msra.mxu0 0.0
    %1020 = vmatprep.subr.mxu0 0.0
    %1021 = vmatpush1.msra.mxu0 0.0
    %1022 = vmatprep.subr.mxu0 0.0
    %1023 = vmatpush1.msra.mxu0 0.0
    %1024 = vmatprep.subr.mxu0 0.0
    %1025 = vmatpush1.msra.mxu0 0.0
    %1026 = vmatprep.subr.mxu0 0.0
    %1027 = vmatpush1.msra.mxu0 0.0
    %1028 = vmatprep.subr.mxu0 0.0
    %1029 = vmatpush1.msra.mxu0 0.0
    %1030 = vmatprep.subr.mxu0 0.0
    %1031 = vmatpush1.msra.mxu0 0.0
    %1032 = vmatprep.subr.mxu0 0.0
    %1033 = vmatpush1.msra.mxu0 0.0
    %1034 = vmatprep.subr.mxu0 0.0
    %1035 = vmatpush1.msra.mxu0 0.0
    %1036 = vmatprep.subr.mxu0 0.0
    %1037 = vmatpush1.msra.mxu0 0.0
    %1038 = vmatprep.subr.mxu0 0.0
    %1039 = vmatpush1.msra.mxu0 0.0
    %1040 = vmatprep.subr.mxu0 0.0
    %1041 = vmatpush1.msra.mxu0 0.0
    %1042 = vmatprep.subr.mxu0 0.0
    %1043 = vmatpush1.msra.mxu0 0.0
    %1044 = vmatprep.mubr.f32.mxu0 0.0
    %1045 = vmatmul.mubr.f32.gmra.mrb[0].mxu0 %v978
    %v1046 = vpop.f32.mrb[0].mxu0
    %v1047 = vadd.f32 0.0, %v1046
    %v1048 = vpop.f32.mrb[0].mxu0
    %v1049 = vadd.f32 0.0, %v1048
    %1050 = vdwg.mxu0
    %1052 = vrot.lane.b32.xlu0 %v974, 32
    %v1053 = vpop.permute.xlu0 %1052
    %v1054 = vsel %vm231, %v1053, 0
    %1056 = vmatprep.subr.mxu0 0.0
    %1057 = vmatpush1.msra.mxu0 %v49
    %1058 = vmatprep.subr.mxu0 0.0
    %1059 = vmatpush1.msra.mxu0 %v50
    %1060 = vmatprep.subr.mxu0 0.0
    %1061 = vmatpush1.msra.mxu0 %v51
    %1062 = vmatprep.subr.mxu0 0.0
    %1063 = vmatpush1.msra.mxu0 %v52
    %1064 = vmatprep.subr.mxu0 0.0
    %1065 = vmatpush1.msra.mxu0 0.0
    %1066 = vmatprep.subr.mxu0 0.0
    %1067 = vmatpush1.msra.mxu0 0.0
    %1068 = vmatprep.subr.mxu0 0.0
    %1069 = vmatpush1.msra.mxu0 0.0
    %1070 = vmatprep.subr.mxu0 0.0
    %1071 = vmatpush1.msra.mxu0 0.0
    %1072 = vmatprep.subr.mxu0 0.0
    %1073 = vmatpush1.msra.mxu0 0.0
    %1074 = vmatprep.subr.mxu0 0.0
    %1075 = vmatpush1.msra.mxu0 0.0
    %1076 = vmatprep.subr.mxu0 0.0
    %1077 = vmatpush1.msra.mxu0 0.0
    %1078 = vmatprep.subr.mxu0 0.0
    %1079 = vmatpush1.msra.mxu0 0.0
    %1080 = vmatprep.subr.mxu0 0.0
    %1081 = vmatpush1.msra.mxu0 0.0
    %1082 = vmatprep.subr.mxu0 0.0
    %1083 = vmatpush1.msra.mxu0 0.0
    %1084 = vmatprep.subr.mxu0 0.0
    %1085 = vmatpush1.msra.mxu0 0.0
    %1086 = vmatprep.subr.mxu0 0.0
    %1087 = vmatpush1.msra.mxu0 0.0
    %1088 = vmatprep.subr.mxu0 0.0
    %1089 = vmatpush1.msra.mxu0 0.0
    %1090 = vmatprep.subr.mxu0 0.0
    %1091 = vmatpush1.msra.mxu0 0.0
    %1092 = vmatprep.subr.mxu0 0.0
    %1093 = vmatpush1.msra.mxu0 0.0
    %1094 = vmatprep.subr.mxu0 0.0
    %1095 = vmatpush1.msra.mxu0 0.0
    %1096 = vmatprep.subr.mxu0 0.0
    %1097 = vmatpush1.msra.mxu0 0.0
    %1098 = vmatprep.subr.mxu0 0.0
    %1099 = vmatpush1.msra.mxu0 0.0
    %1100 = vmatprep.subr.mxu0 0.0
    %1101 = vmatpush1.msra.mxu0 0.0
    %1102 = vmatprep.subr.mxu0 0.0
    %1103 = vmatpush1.msra.mxu0 0.0
    %1104 = vmatprep.subr.mxu0 0.0
    %1105 = vmatpush1.msra.mxu0 0.0
    %1106 = vmatprep.subr.mxu0 0.0
    %1107 = vmatpush1.msra.mxu0 0.0
    %1108 = vmatprep.subr.mxu0 0.0
    %1109 = vmatpush1.msra.mxu0 0.0
    %1110 = vmatprep.subr.mxu0 0.0
    %1111 = vmatpush1.msra.mxu0 0.0
    %1112 = vmatprep.subr.mxu0 0.0
    %1113 = vmatpush1.msra.mxu0 0.0
    %1114 = vmatprep.subr.mxu0 0.0
    %1115 = vmatpush1.msra.mxu0 0.0
    %1116 = vmatprep.subr.mxu0 0.0
    %1117 = vmatpush1.msra.mxu0 0.0
    %1118 = vmatprep.subr.mxu0 0.0
    %1119 = vmatpush1.msra.mxu0 0.0
    %1120 = vmatprep.mubr.f32.mxu0 0.0
    %1121 = vmatmul.mubr.f32.gmra.mrb[0].mxu0 %v1054
    %v1122 = vpop.f32.mrb[0].mxu0
    %v1123 = vadd.f32 0.0, %v1122
    %v1124 = vpop.f32.mrb[0].mxu0
    %1125 = vdwg.mxu0
    %v1126 = vadd.f32 %v185, %v1047
    %v1127 = vxor.u32 %v1126, 2147483648
    %v1128 = vmul.f32 %v1127, 1.442695
    %v1129 = vpow.pop %v1128
    %v1130 = vadd.f32 %v1129, 1.0
    %v1131 = vrcp.pop %v1130
    %v1132 = vmul.f32 1.0, %v1131
    %v1133 = vtanh.pop %v1126
    %v1134 = vsel %vm202, %v1133, %v1132
    %v1135 = vmul.f32 %v1134, %v941
    %1137 = vrot.lane.b32.xlu0 %v1134, 64
    %v1138 = vpop.permute.xlu0 %1137
    %v1140 = vmul.f32 %v1134, %v1138
    %1142 = vrot.lane.b32.xlu0 %v1140, 32
    %v1143 = vpop.permute.xlu0 %1142
    %v1145 = vadd.f32 %v1135, %v1143
    %v1146 = vtanh.pop %v1145
    %1148 = vrot.lane.b32.xlu0 %v1146, 64
    %v1149 = vpop.permute.xlu0 %1148
    %v1151 = vmul.f32 %v1134, %v1149
    %v1152 = vadd.f32 %v1049, %v335
    %v1153 = vadd.f32 %v1152, %v1123
    %v1154 = vxor.u32 %v1153, 2147483648
    %v1155 = vmul.f32 %v1154, 1.442695
    %v1156 = vpow.pop %v1155
    %v1157 = vadd.f32 %v1156, 1.0
    %v1158 = vrcp.pop %v1157
    %v1159 = vmul.f32 1.0, %v1158
    %v1160 = vtanh.pop %v1153
    %v1161 = vsel %vm202, %v1160, %v1159
    %v1162 = vmul.f32 %v1161, %v968
    %1164 = vrot.lane.b32.xlu0 %v1161, 64
    %v1165 = vpop.permute.xlu0 %1164
    %v1167 = vmul.f32 %v1161, %v1165
    %1169 = vrot.lane.b32.xlu0 %v1167, 32
    %v1170 = vpop.permute.xlu0 %1169
    %v1172 = vadd.f32 %v1162, %v1170
    %v1173 = vtanh.pop %v1172
    %1175 = vrot.lane.b32.xlu0 %v1173, 64
    %v1176 = vpop.permute.xlu0 %1175
    %v1178 = vmul.f32 %v1161, %v1176
    %1180 = vrot.lane.b32.xlu0 %v1151, 32
    %v1181 = vpop.permute.xlu0 %1180
    %v1182 = vsel %vm231, %v1181, 0
    %1184 = vmatprep.subr.mxu0 %v42
    %1185 = vmatpush1.msra.mxu0 %v41
    %1186 = vmatprep.subr.mxu0 %v44
    %1187 = vmatpush1.msra.mxu0 %v43
    %1188 = vmatprep.subr.mxu0 %v46
    %1189 = vmatpush1.msra.mxu0 %v45
    %1190 = vmatprep.subr.mxu0 %v48
    %1191 = vmatpush1.msra.mxu0 %v47
    %1192 = vmatprep.subr.mxu0 0.0
    %1193 = vmatpush1.msra.mxu0 0.0
    %1194 = vmatprep.subr.mxu0 0.0
    %1195 = vmatpush1.msra.mxu0 0.0
    %1196 = vmatprep.subr.mxu0 0.0
    %1197 = vmatpush1.msra.mxu0 0.0
    %1198 = vmatprep.subr.mxu0 0.0
    %1199 = vmatpush1.msra.mxu0 0.0
    %1200 = vmatprep.subr.mxu0 0.0
    %1201 = vmatpush1.msra.mxu0 0.0
    %1202 = vmatprep.subr.mxu0 0.0
    %1203 = vmatpush1.msra.mxu0 0.0
    %1204 = vmatprep.subr.mxu0 0.0
    %1205 = vmatpush1.msra.mxu0 0.0
    %1206 = vmatprep.subr.mxu0 0.0
    %1207 = vmatpush1.msra.mxu0 0.0
    %1208 = vmatprep.subr.mxu0 0.0
    %1209 = vmatpush1.msra.mxu0 0.0
    %1210 = vmatprep.subr.mxu0 0.0
    %1211 = vmatpush1.msra.mxu0 0.0
    %1212 = vmatprep.subr.mxu0 0.0
    %1213 = vmatpush1.msra.mxu0 0.0
    %1214 = vmatprep.subr.mxu0 0.0
    %1215 = vmatpush1.msra.mxu0 0.0
    %1216 = vmatprep.subr.mxu0 0.0
    %1217 = vmatpush1.msra.mxu0 0.0
    %1218 = vmatprep.subr.mxu0 0.0
    %1219 = vmatpush1.msra.mxu0 0.0
    %1220 = vmatprep.subr.mxu0 0.0
    %1221 = vmatpush1.msra.mxu0 0.0
    %1222 = vmatprep.subr.mxu0 0.0
    %1223 = vmatpush1.msra.mxu0 0.0
    %1224 = vmatprep.subr.mxu0 0.0
    %1225 = vmatpush1.msra.mxu0 0.0
    %1226 = vmatprep.subr.mxu0 0.0
    %1227 = vmatpush1.msra.mxu0 0.0
    %1228 = vmatprep.subr.mxu0 0.0
    %1229 = vmatpush1.msra.mxu0 0.0
    %1230 = vmatprep.subr.mxu0 0.0
    %1231 = vmatpush1.msra.mxu0 0.0
    %1232 = vmatprep.subr.mxu0 0.0
    %1233 = vmatpush1.msra.mxu0 0.0
    %1234 = vmatprep.subr.mxu0 0.0
    %1235 = vmatpush1.msra.mxu0 0.0
    %1236 = vmatprep.subr.mxu0 0.0
    %1237 = vmatpush1.msra.mxu0 0.0
    %1238 = vmatprep.subr.mxu0 0.0
    %1239 = vmatpush1.msra.mxu0 0.0
    %1240 = vmatprep.subr.mxu0 0.0
    %1241 = vmatpush1.msra.mxu0 0.0
    %1242 = vmatprep.subr.mxu0 0.0
    %1243 = vmatpush1.msra.mxu0 0.0
    %1244 = vmatprep.subr.mxu0 0.0
    %1245 = vmatpush1.msra.mxu0 0.0
    %1246 = vmatprep.subr.mxu0 0.0
    %1247 = vmatpush1.msra.mxu0 0.0
    %1248 = vmatprep.mubr.f32.mxu0 0.0
    %1249 = vmatmul.mubr.f32.gmra.mrb[0].mxu0 %v1182
    %v1250 = vpop.f32.mrb[0].mxu0
    %v1251 = vadd.f32 0.0, %v1250
    %v1252 = vpop.f32.mrb[0].mxu0
    %v1253 = vadd.f32 0.0, %v1252
    %1254 = vdwg.mxu0
    %1256 = vrot.lane.b32.xlu0 %v1178, 32
    %v1257 = vpop.permute.xlu0 %1256
    %v1258 = vsel %vm231, %v1257, 0
    %1260 = vmatprep.subr.mxu0 0.0
    %1261 = vmatpush1.msra.mxu0 %v49
    %1262 = vmatprep.subr.mxu0 0.0
    %1263 = vmatpush1.msra.mxu0 %v50
    %1264 = vmatprep.subr.mxu0 0.0
    %1265 = vmatpush1.msra.mxu0 %v51
    %1266 = vmatprep.subr.mxu0 0.0
    %1267 = vmatpush1.msra.mxu0 %v52
    %1268 = vmatprep.subr.mxu0 0.0
    %1269 = vmatpush1.msra.mxu0 0.0
    %1270 = vmatprep.subr.mxu0 0.0
    %1271 = vmatpush1.msra.mxu0 0.0
    %1272 = vmatprep.subr.mxu0 0.0
    %1273 = vmatpush1.msra.mxu0 0.0
    %1274 = vmatprep.subr.mxu0 0.0
    %1275 = vmatpush1.msra.mxu0 0.0
    %1276 = vmatprep.subr.mxu0 0.0
    %1277 = vmatpush1.msra.mxu0 0.0
    %1278 = vmatprep.subr.mxu0 0.0
    %1279 = vmatpush1.msra.mxu0 0.0
    %1280 = vmatprep.subr.mxu0 0.0
    %1281 = vmatpush1.msra.mxu0 0.0
    %1282 = vmatprep.subr.mxu0 0.0
    %1283 = vmatpush1.msra.mxu0 0.0
    %1284 = vmatprep.subr.mxu0 0.0
    %1285 = vmatpush1.msra.mxu0 0.0
    %1286 = vmatprep.subr.mxu0 0.0
    %1287 = vmatpush1.msra.mxu0 0.0
    %1288 = vmatprep.subr.mxu0 0.0
    %1289 = vmatpush1.msra.mxu0 0.0
    %1290 = vmatprep.subr.mxu0 0.0
    %1291 = vmatpush1.msra.mxu0 0.0
    %1292 = vmatprep.subr.mxu0 0.0
    %1293 = vmatpush1.msra.mxu0 0.0
    %1294 = vmatprep.subr.mxu0 0.0
    %1295 = vmatpush1.msra.mxu0 0.0
    %1296 = vmatprep.subr.mxu0 0.0
    %1297 = vmatpush1.msra.mxu0 0.0
    %1298 = vmatprep.subr.mxu0 0.0
    %1299 = vmatpush1.msra.mxu0 0.0
    %1300 = vmatprep.subr.mxu0 0.0
    %1301 = vmatpush1.msra.mxu0 0.0
    %1302 = vmatprep.subr.mxu0 0.0
    %1303 = vmatpush1.msra.mxu0 0.0
    %1304 = vmatprep.subr.mxu0 0.0
    %1305 = vmatpush1.msra.mxu0 0.0
    %1306 = vmatprep.subr.mxu0 0.0
    %1307 = vmatpush1.msra.mxu0 0.0
    %1308 = vmatprep.subr.mxu0 0.0
    %1309 = vmatpush1.msra.mxu0 0.0
    %1310 = vmatprep.subr.mxu0 0.0
    %1311 = vmatpush1.msra.mxu0 0.0
    %1312 = vmatprep.subr.mxu0 0.0
    %1313 = vmatpush1.msra.mxu0 0.0
    %1314 = vmatprep.subr.mxu0 0.0
    %1315 = vmatpush1.msra.mxu0 0.0
    %1316 = vmatprep.subr.mxu0 0.0
    %1317 = vmatpush1.msra.mxu0 0.0
    %1318 = vmatprep.subr.mxu0 0.0
    %1319 = vmatpush1.msra.mxu0 0.0
    %1320 = vmatprep.subr.mxu0 0.0
    %1321 = vmatpush1.msra.mxu0 0.0
    %1322 = vmatprep.subr.mxu0 0.0
    %1323 = vmatpush1.msra.mxu0 0.0
    %1324 = vmatprep.mubr.f32.mxu0 0.0
    %1325 = vmatmul.mubr.f32.gmra.mrb[0].mxu0 %v1258
    %v1326 = vpop.f32.mrb[0].mxu0
    %v1327 = vadd.f32 0.0, %v1326
    %v1328 = vpop.f32.mrb[0].mxu0
    %1329 = vdwg.mxu0
    %v1330 = vadd.f32 %v190, %v1251
    %v1331 = vxor.u32 %v1330, 2147483648
    %v1332 = vmul.f32 %v1331, 1.442695
    %v1333 = vpow.pop %v1332
    %v1334 = vadd.f32 %v1333, 1.0
    %v1335 = vrcp.pop %v1334
    %v1336 = vmul.f32 1.0, %v1335
    %v1337 = vtanh.pop %v1330
    %v1338 = vsel %vm202, %v1337, %v1336
    %v1339 = vmul.f32 %v1338, %v1145
    %1341 = vrot.lane.b32.xlu0 %v1338, 64
    %v1342 = vpop.permute.xlu0 %1341
    %v1344 = vmul.f32 %v1338, %v1342
    %1346 = vrot.lane.b32.xlu0 %v1344, 32
    %v1347 = vpop.permute.xlu0 %1346
    %v1349 = vadd.f32 %v1339, %v1347
    %v1350 = vtanh.pop %v1349
    %1352 = vrot.lane.b32.xlu0 %v1350, 64
    %v1353 = vpop.permute.xlu0 %1352
    %v1355 = vmul.f32 %v1338, %v1353
    %v1356 = vadd.f32 %v1253, %v335
    %v1357 = vadd.f32 %v1356, %v1327
    %v1358 = vxor.u32 %v1357, 2147483648
    %v1359 = vmul.f32 %v1358, 1.442695
    %v1360 = vpow.pop %v1359
    %v1361 = vadd.f32 %v1360, 1.0
    %v1362 = vrcp.pop %v1361
    %v1363 = vmul.f32 1.0, %v1362
    %v1364 = vtanh.pop %v1357
    %v1365 = vsel %vm202, %v1364, %v1363
    %v1366 = vmul.f32 %v1365, %v1172
    %1368 = vrot.lane.b32.xlu0 %v1365, 64
    %v1369 = vpop.permute.xlu0 %1368
    %v1371 = vmul.f32 %v1365, %v1369
    %1373 = vrot.lane.b32.xlu0 %v1371, 32
    %v1374 = vpop.permute.xlu0 %1373
    %v1376 = vadd.f32 %v1366, %v1374
    %v1377 = vtanh.pop %v1376
    %1379 = vrot.lane.b32.xlu0 %v1377, 64
    %v1380 = vpop.permute.xlu0 %1379
    %v1382 = vmul.f32 %v1365, %v1380
    %1384 = vrot.lane.b32.xlu0 %v1355, 32
    %v1385 = vpop.permute.xlu0 %1384
    %v1386 = vsel %vm231, %v1385, 0
    %1388 = vmatprep.subr.mxu0 %v42
    %1389 = vmatpush1.msra.mxu0 %v41
    %1390 = vmatprep.subr.mxu0 %v44
    %1391 = vmatpush1.msra.mxu0 %v43
    %1392 = vmatprep.subr.mxu0 %v46
    %1393 = vmatpush1.msra.mxu0 %v45
    %1394 = vmatprep.subr.mxu0 %v48
    %1395 = vmatpush1.msra.mxu0 %v47
    %1396 = vmatprep.subr.mxu0 0.0
    %1397 = vmatpush1.msra.mxu0 0.0
    %1398 = vmatprep.subr.mxu0 0.0
    %1399 = vmatpush1.msra.mxu0 0.0
    %1400 = vmatprep.subr.mxu0 0.0
    %1401 = vmatpush1.msra.mxu0 0.0
    %1402 = vmatprep.subr.mxu0 0.0
    %1403 = vmatpush1.msra.mxu0 0.0
    %1404 = vmatprep.subr.mxu0 0.0
    %1405 = vmatpush1.msra.mxu0 0.0
    %1406 = vmatprep.subr.mxu0 0.0
    %1407 = vmatpush1.msra.mxu0 0.0
    %1408 = vmatprep.subr.mxu0 0.0
    %1409 = vmatpush1.msra.mxu0 0.0
    %1410 = vmatprep.subr.mxu0 0.0
    %1411 = vmatpush1.msra.mxu0 0.0
    %1412 = vmatprep.subr.mxu0 0.0
    %1413 = vmatpush1.msra.mxu0 0.0
    %1414 = vmatprep.subr.mxu0 0.0
    %1415 = vmatpush1.msra.mxu0 0.0
    %1416 = vmatprep.subr.mxu0 0.0
    %1417 = vmatpush1.msra.mxu0 0.0
    %1418 = vmatprep.subr.mxu0 0.0
    %1419 = vmatpush1.msra.mxu0 0.0
    %1420 = vmatprep.subr.mxu0 0.0
    %1421 = vmatpush1.msra.mxu0 0.0
    %1422 = vmatprep.subr.mxu0 0.0
    %1423 = vmatpush1.msra.mxu0 0.0
    %1424 = vmatprep.subr.mxu0 0.0
    %1425 = vmatpush1.msra.mxu0 0.0
    %1426 = vmatprep.subr.mxu0 0.0
    %1427 = vmatpush1.msra.mxu0 0.0
    %1428 = vmatprep.subr.mxu0 0.0
    %1429 = vmatpush1.msra.mxu0 0.0
    %1430 = vmatprep.subr.mxu0 0.0
    %1431 = vmatpush1.msra.mxu0 0.0
    %1432 = vmatprep.subr.mxu0 0.0
    %1433 = vmatpush1.msra.mxu0 0.0
    %1434 = vmatprep.subr.mxu0 0.0
    %1435 = vmatpush1.msra.mxu0 0.0
    %1436 = vmatprep.subr.mxu0 0.0
    %1437 = vmatpush1.msra.mxu0 0.0
    %1438 = vmatprep.subr.mxu0 0.0
    %1439 = vmatpush1.msra.mxu0 0.0
    %1440 = vmatprep.subr.mxu0 0.0
    %1441 = vmatpush1.msra.mxu0 0.0
    %1442 = vmatprep.subr.mxu0 0.0
    %1443 = vmatpush1.msra.mxu0 0.0
    %1444 = vmatprep.subr.mxu0 0.0
    %1445 = vmatpush1.msra.mxu0 0.0
    %1446 = vmatprep.subr.mxu0 0.0
    %1447 = vmatpush1.msra.mxu0 0.0
    %1448 = vmatprep.subr.mxu0 0.0
    %1449 = vmatpush1.msra.mxu0 0.0
    %1450 = vmatprep.subr.mxu0 0.0
    %1451 = vmatpush1.msra.mxu0 0.0
    %1452 = vmatprep.mubr.f32.mxu0 0.0
    %1453 = vmatmul.mubr.f32.gmra.mrb[0].mxu0 %v1386
    %v1454 = vpop.f32.mrb[0].mxu0
    %v1455 = vadd.f32 0.0, %v1454
    %v1456 = vpop.f32.mrb[0].mxu0
    %v1457 = vadd.f32 0.0, %v1456
    %1458 = vdwg.mxu0
    %1460 = vrot.lane.b32.xlu0 %v1382, 32
    %v1461 = vpop.permute.xlu0 %1460
    %v1462 = vsel %vm231, %v1461, 0
    %1464 = vmatprep.subr.mxu0 0.0
    %1465 = vmatpush1.msra.mxu0 %v49
    %1466 = vmatprep.subr.mxu0 0.0
    %1467 = vmatpush1.msra.mxu0 %v50
    %1468 = vmatprep.subr.mxu0 0.0
    %1469 = vmatpush1.msra.mxu0 %v51
    %1470 = vmatprep.subr.mxu0 0.0
    %1471 = vmatpush1.msra.mxu0 %v52
    %1472 = vmatprep.subr.mxu0 0.0
    %1473 = vmatpush1.msra.mxu0 0.0
    %1474 = vmatprep.subr.mxu0 0.0
    %1475 = vmatpush1.msra.mxu0 0.0
    %1476 = vmatprep.subr.mxu0 0.0
    %1477 = vmatpush1.msra.mxu0 0.0
    %1478 = vmatprep.subr.mxu0 0.0
    %1479 = vmatpush1.msra.mxu0 0.0
    %1480 = vmatprep.subr.mxu0 0.0
    %1481 = vmatpush1.msra.mxu0 0.0
    %1482 = vmatprep.subr.mxu0 0.0
    %1483 = vmatpush1.msra.mxu0 0.0
    %1484 = vmatprep.subr.mxu0 0.0
    %1485 = vmatpush1.msra.mxu0 0.0
    %1486 = vmatprep.subr.mxu0 0.0
    %1487 = vmatpush1.msra.mxu0 0.0
    %1488 = vmatprep.subr.mxu0 0.0
    %1489 = vmatpush1.msra.mxu0 0.0
    %1490 = vmatprep.subr.mxu0 0.0
    %1491 = vmatpush1.msra.mxu0 0.0
    %1492 = vmatprep.subr.mxu0 0.0
    %1493 = vmatpush1.msra.mxu0 0.0
    %1494 = vmatprep.subr.mxu0 0.0
    %1495 = vmatpush1.msra.mxu0 0.0
    %1496 = vmatprep.subr.mxu0 0.0
    %1497 = vmatpush1.msra.mxu0 0.0
    %1498 = vmatprep.subr.mxu0 0.0
    %1499 = vmatpush1.msra.mxu0 0.0
    %1500 = vmatprep.subr.mxu0 0.0
    %1501 = vmatpush1.msra.mxu0 0.0
    %1502 = vmatprep.subr.mxu0 0.0
    %1503 = vmatpush1.msra.mxu0 0.0
    %1504 = vmatprep.subr.mxu0 0.0
    %1505 = vmatpush1.msra.mxu0 0.0
    %1506 = vmatprep.subr.mxu0 0.0
    %1507 = vmatpush1.msra.mxu0 0.0
    %1508 = vmatprep.subr.mxu0 0.0
    %1509 = vmatpush1.msra.mxu0 0.0
    %1510 = vmatprep.subr.mxu0 0.0
    %1511 = vmatpush1.msra.mxu0 0.0
    %1512 = vmatprep.subr.mxu0 0.0
    %1513 = vmatpush1.msra.mxu0 0.0
    %1514 = vmatprep.subr.mxu0 0.0
    %1515 = vmatpush1.msra.mxu0 0.0
    %1516 = vmatprep.subr.mxu0 0.0
    %1517 = vmatpush1.msra.mxu0 0.0
    %1518 = vmatprep.subr.mxu0 0.0
    %1519 = vmatpush1.msra.mxu0 0.0
    %1520 = vmatprep.subr.mxu0 0.0
    %1521 = vmatpush1.msra.mxu0 0.0
    %1522 = vmatprep.subr.mxu0 0.0
    %1523 = vmatpush1.msra.mxu0 0.0
    %1524 = vmatprep.subr.mxu0 0.0
    %1525 = vmatpush1.msra.mxu0 0.0
    %1526 = vmatprep.subr.mxu0 0.0
    %1527 = vmatpush1.msra.mxu0 0.0
    %1528 = vmatprep.mubr.f32.mxu0 0.0
    %1529 = vmatmul.mubr.f32.gmra.mrb[0].mxu0 %v1462
    %v1530 = vpop.f32.mrb[0].mxu0
    %v1531 = vadd.f32 0.0, %v1530
    %v1532 = vpop.f32.mrb[0].mxu0
    %1533 = vdwg.mxu0
    %v1534 = vadd.f32 %v195, %v1455
    %v1535 = vxor.u32 %v1534, 2147483648
    %v1536 = vmul.f32 %v1535, 1.442695
    %v1537 = vpow.pop %v1536
    %v1538 = vadd.f32 %v1537, 1.0
    %v1539 = vrcp.pop %v1538
    %v1540 = vmul.f32 1.0, %v1539
    %v1541 = vtanh.pop %v1534
    %v1542 = vsel %vm202, %v1541, %v1540
    %v1543 = vmul.f32 %v1542, %v1349
    %1545 = vrot.lane.b32.xlu0 %v1542, 64
    %v1546 = vpop.permute.xlu0 %1545
    %v1548 = vmul.f32 %v1542, %v1546
    %1550 = vrot.lane.b32.xlu0 %v1548, 32
    %v1551 = vpop.permute.xlu0 %1550
    %v1553 = vadd.f32 %v1543, %v1551
    %v1554 = vtanh.pop %v1553
    %1556 = vrot.lane.b32.xlu0 %v1554, 64
    %v1557 = vpop.permute.xlu0 %1556
    %v1559 = vmul.f32 %v1542, %v1557
    %v1560 = vadd.f32 %v1457, %v335
    %v1561 = vadd.f32 %v1560, %v1531
    %v1562 = vxor.u32 %v1561, 2147483648
    %v1563 = vmul.f32 %v1562, 1.442695
    %v1564 = vpow.pop %v1563
    %v1565 = vadd.f32 %v1564, 1.0
    %v1566 = vrcp.pop %v1565
    %v1567 = vmul.f32 1.0, %v1566
    %v1568 = vtanh.pop %v1561
    %v1569 = vsel %vm202, %v1568, %v1567
    %v1570 = vmul.f32 %v1569, %v1376
    %1572 = vrot.lane.b32.xlu0 %v1569, 64
    %v1573 = vpop.permute.xlu0 %1572
    %v1575 = vmul.f32 %v1569, %v1573
    %1577 = vrot.lane.b32.xlu0 %v1575, 32
    %v1578 = vpop.permute.xlu0 %1577
    %v1580 = vadd.f32 %v1570, %v1578
    %v1581 = vtanh.pop %v1580
    %1583 = vrot.lane.b32.xlu0 %v1581, 64
    %v1584 = vpop.permute.xlu0 %1583
    %v1586 = vmul.f32 %v1569, %v1584
    %1588 = vrot.lane.b32.xlu0 %v1559, 32
    %v1589 = vpop.permute.xlu0 %1588
    %v1590 = vsel %vm231, %v1589, 0
    %1592 = vmatprep.subr.mxu0 %v42
    %1593 = vmatpush1.msra.mxu0 %v41
    %1594 = vmatprep.subr.mxu0 %v44
    %1595 = vmatpush1.msra.mxu0 %v43
    %1596 = vmatprep.subr.mxu0 %v46
    %1597 = vmatpush1.msra.mxu0 %v45
    %1598 = vmatprep.subr.mxu0 %v48
    %1599 = vmatpush1.msra.mxu0 %v47
    %1600 = vmatprep.subr.mxu0 0.0
    %1601 = vmatpush1.msra.mxu0 0.0
    %1602 = vmatprep.subr.mxu0 0.0
    %1603 = vmatpush1.msra.mxu0 0.0
    %1604 = vmatprep.subr.mxu0 0.0
    %1605 = vmatpush1.msra.mxu0 0.0
    %1606 = vmatprep.subr.mxu0 0.0
    %1607 = vmatpush1.msra.mxu0 0.0
    %1608 = vmatprep.subr.mxu0 0.0
    %1609 = vmatpush1.msra.mxu0 0.0
    %1610 = vmatprep.subr.mxu0 0.0
    %1611 = vmatpush1.msra.mxu0 0.0
    %1612 = vmatprep.subr.mxu0 0.0
    %1613 = vmatpush1.msra.mxu0 0.0
    %1614 = vmatprep.subr.mxu0 0.0
    %1615 = vmatpush1.msra.mxu0 0.0
    %1616 = vmatprep.subr.mxu0 0.0
    %1617 = vmatpush1.msra.mxu0 0.0
    %1618 = vmatprep.subr.mxu0 0.0
    %1619 = vmatpush1.msra.mxu0 0.0
    %1620 = vmatprep.subr.mxu0 0.0
    %1621 = vmatpush1.msra.mxu0 0.0
    %1622 = vmatprep.subr.mxu0 0.0
    %1623 = vmatpush1.msra.mxu0 0.0
    %1624 = vmatprep.subr.mxu0 0.0
    %1625 = vmatpush1.msra.mxu0 0.0
    %1626 = vmatprep.subr.mxu0 0.0
    %1627 = vmatpush1.msra.mxu0 0.0
    %1628 = vmatprep.subr.mxu0 0.0
    %1629 = vmatpush1.msra.mxu0 0.0
    %1630 = vmatprep.subr.mxu0 0.0
    %1631 = vmatpush1.msra.mxu0 0.0
    %1632 = vmatprep.subr.mxu0 0.0
    %1633 = vmatpush1.msra.mxu0 0.0
    %1634 = vmatprep.subr.mxu0 0.0
    %1635 = vmatpush1.msra.mxu0 0.0
    %1636 = vmatprep.subr.mxu0 0.0
    %1637 = vmatpush1.msra.mxu0 0.0
    %1638 = vmatprep.subr.mxu0 0.0
    %1639 = vmatpush1.msra.mxu0 0.0
    %1640 = vmatprep.subr.mxu0 0.0
    %1641 = vmatpush1.msra.mxu0 0.0
    %1642 = vmatprep.subr.mxu0 0.0
    %1643 = vmatpush1.msra.mxu0 0.0
    %1644 = vmatprep.subr.mxu0 0.0
    %1645 = vmatpush1.msra.mxu0 0.0
    %1646 = vmatprep.subr.mxu0 0.0
    %1647 = vmatpush1.msra.mxu0 0.0
    %1648 = vmatprep.subr.mxu0 0.0
    %1649 = vmatpush1.msra.mxu0 0.0
    %1650 = vmatprep.subr.mxu0 0.0
    %1651 = vmatpush1.msra.mxu0 0.0
    %1652 = vmatprep.subr.mxu0 0.0
    %1653 = vmatpush1.msra.mxu0 0.0
    %1654 = vmatprep.subr.mxu0 0.0
    %1655 = vmatpush1.msra.mxu0 0.0
    %1656 = vmatprep.mubr.f32.mxu0 0.0
    %1657 = vmatmul.mubr.f32.gmra.mrb[0].mxu0 %v1590
    %v1658 = vpop.f32.mrb[0].mxu0
    %v1659 = vpop.f32.mrb[0].mxu0
    %v1660 = vadd.f32 0.0, %v1659
    %1661 = vdwg.mxu0
    %1663 = vrot.lane.b32.xlu0 %v1586, 32
    %v1664 = vpop.permute.xlu0 %1663
    %v1665 = vsel %vm231, %v1664, 0
    %1667 = vmatprep.subr.mxu0 0.0
    %1668 = vmatpush1.msra.mxu0 %v49
    %1669 = vmatprep.subr.mxu0 0.0
    %1670 = vmatpush1.msra.mxu0 %v50
    %1671 = vmatprep.subr.mxu0 0.0
    %1672 = vmatpush1.msra.mxu0 %v51
    %1673 = vmatprep.subr.mxu0 0.0
    %1674 = vmatpush1.msra.mxu0 %v52
    %1675 = vmatprep.subr.mxu0 0.0
    %1676 = vmatpush1.msra.mxu0 0.0
    %1677 = vmatprep.subr.mxu0 0.0
    %1678 = vmatpush1.msra.mxu0 0.0
    %1679 = vmatprep.subr.mxu0 0.0
    %1680 = vmatpush1.msra.mxu0 0.0
    %1681 = vmatprep.subr.mxu0 0.0
    %1682 = vmatpush1.msra.mxu0 0.0
    %1683 = vmatprep.subr.mxu0 0.0
    %1684 = vmatpush1.msra.mxu0 0.0
    %1685 = vmatprep.subr.mxu0 0.0
    %1686 = vmatpush1.msra.mxu0 0.0
    %1687 = vmatprep.subr.mxu0 0.0
    %1688 = vmatpush1.msra.mxu0 0.0
    %1689 = vmatprep.subr.mxu0 0.0
    %1690 = vmatpush1.msra.mxu0 0.0
    %1691 = vmatprep.subr.mxu0 0.0
    %1692 = vmatpush1.msra.mxu0 0.0
    %1693 = vmatprep.subr.mxu0 0.0
    %1694 = vmatpush1.msra.mxu0 0.0
    %1695 = vmatprep.subr.mxu0 0.0
    %1696 = vmatpush1.msra.mxu0 0.0
    %1697 = vmatprep.subr.mxu0 0.0
    %1698 = vmatpush1.msra.mxu0 0.0
    %1699 = vmatprep.subr.mxu0 0.0
    %1700 = vmatpush1.msra.mxu0 0.0
    %1701 = vmatprep.subr.mxu0 0.0
    %1702 = vmatpush1.msra.mxu0 0.0
    %1703 = vmatprep.subr.mxu0 0.0
    %1704 = vmatpush1.msra.mxu0 0.0
    %1705 = vmatprep.subr.mxu0 0.0
    %1706 = vmatpush1.msra.mxu0 0.0
    %1707 = vmatprep.subr.mxu0 0.0
    %1708 = vmatpush1.msra.mxu0 0.0
    %1709 = vmatprep.subr.mxu0 0.0
    %1710 = vmatpush1.msra.mxu0 0.0
    %1711 = vmatprep.subr.mxu0 0.0
    %1712 = vmatpush1.msra.mxu0 0.0
    %1713 = vmatprep.subr.mxu0 0.0
    %1714 = vmatpush1.msra.mxu0 0.0
    %1715 = vmatprep.subr.mxu0 0.0
    %1716 = vmatpush1.msra.mxu0 0.0
    %1717 = vmatprep.subr.mxu0 0.0
    %1718 = vmatpush1.msra.mxu0 0.0
    %1719 = vmatprep.subr.mxu0 0.0
    %1720 = vmatpush1.msra.mxu0 0.0
    %1721 = vmatprep.subr.mxu0 0.0
    %1722 = vmatpush1.msra.mxu0 0.0
    %1723 = vmatprep.subr.mxu0 0.0
    %1724 = vmatpush1.msra.mxu0 0.0
    %1725 = vmatprep.subr.mxu0 0.0
    %1726 = vmatpush1.msra.mxu0 0.0
    %1727 = vmatprep.subr.mxu0 0.0
    %1728 = vmatpush1.msra.mxu0 0.0
    %1729 = vmatprep.subr.mxu0 0.0
    %1730 = vmatpush1.msra.mxu0 0.0
    %1731 = vmatprep.mubr.f32.mxu0 0.0
    %1732 = vmatmul.mubr.f32.gmra.mrb[0].mxu0 %v1665
    %v1733 = vpop.f32.mrb[0].mxu0
    %v1734 = vadd.f32 0.0, %v1733
    %v1735 = vpop.f32.mrb[0].mxu0
    %1736 = vdwg.mxu0
    %v1737 = vadd.f32 %v1660, %v335
    %v1738 = vadd.f32 %v1737, %v1734
    %v1739 = vxor.u32 %v1738, 2147483648
    %v1740 = vmul.f32 %v1739, 1.442695
    %v1741 = vpow.pop %v1740
    %v1742 = vadd.f32 %v1741, 1.0
    %v1743 = vrcp.pop %v1742
    %v1744 = vmul.f32 1.0, %v1743
    %v1745 = vtanh.pop %v1738
    %v1746 = vsel %vm202, %v1745, %v1744
    %v1747 = vmul.f32 %v1746, %v1580
    %1749 = vrot.lane.b32.xlu0 %v1746, 64
    %v1750 = vpop.permute.xlu0 %1749
    %v1752 = vmul.f32 %v1746, %v1750
    %1754 = vrot.lane.b32.xlu0 %v1752, 32
    %v1755 = vpop.permute.xlu0 %1754
    %v1757 = vadd.f32 %v1747, %v1755
    %v1758 = vtanh.pop %v1757
    %1760 = vrot.lane.b32.xlu0 %v1758, 64
    %v1761 = vpop.permute.xlu0 %1760
    %v1763 = vmul.f32 %v1746, %v1761
    %1765 = vrot.lane.b32.xlu0 %v1763, 32
    %v1766 = vpop.permute.xlu0 %1765
    %vm1768 = vcmask 254976
    %1769 = vst.msk [vmem:[#allocation5] sm:$0x3] %vm1768, %v1766
    // Predicated region
    $region30: #{_lambda_.1} parent=1 // pred_check
      _
    $region31: #{_lambda_.1} parent=1 // pred_check_branch
      %1771 = sbr.rel (0) target = $region33
    $region32: #{_lambda_.1} parent=1 // pred_region
      %s1773 = ssub.s32 32, 32
      %1774 = vsyncadd [#allocation4], %s1773
      %s1776 = sshll.u32 [#allocation5], 4
      %s1777 = int_to_ptr.vmem [resolvable:$true] %s1776
      %1779 = dma.vmem_to_hbm [thread:$0]  %s1777, 32, %s6, [#allocation4]
    $region33: #{_lambda_.1} parent=1 // pred_fallthru
      _
    // Predicated region
    $region34: #{_lambda_.1} parent=1 // pred_check
      _
    $region35: #{_lambda_.1} parent=1 // pred_check_branch
      %1781 = sbr.rel (0) target = $region37
    $region36: #{_lambda_.1} parent=1 // pred_region
      %1782 = dma.done [#allocation4], 32
    $region37: #{_lambda_.1} parent=1 // pred_fallthru
      _
    %1783 = vsyncpa [#allocation3], 1
    %1784 = vsyncpa [#allocation4], 1

</llo_original>
